<compile_context>
chip_gen: v5e
topology: v5e:2x2
jax: 0.10.0
libtpu: 0.0.40
codegen_flags: <defaults>
</compile_context>

<pallas_src>
import math
import numpy as np
import jax
import jax.numpy as jnp
from jax import lax
from jax.experimental import pallas as pl
from jax.experimental.pallas import tpu as pltpu

NH = 8              # hard-coded `nh = 8` inside CausalSelfAttention.forward
LN_EPS = 1e-5       # nn.LayerNorm default
VMEM_LIMIT = 48 * 1024 * 1024


def _layernorm(x, g, b):
    mu = jnp.mean(x, axis=-1, keepdims=True)
    var = jnp.mean((x - mu) ** 2, axis=-1, keepdims=True)
    return (x - mu) * lax.rsqrt(var + LN_EPS) * g + b


# ----------------------------------------------------------------------------
# Kernel 1: ln_1 + QKV projection (+bias) + rotary.
# Q/K weight columns are pre-permuted head-contiguously ([evens | odds] inside
# each head) and Q is pre-scaled by 1/sqrt(hd). The rotation is
#   q_rot = q*cosT + roll(q,+half)*[-sin|0] + roll(q,-half)*[0|+sin]
# per head, implemented with full-width lane rotations (static slices+concat),
# so the rotated output is already head-contiguous for K2.
# ----------------------------------------------------------------------------
def qkv_rope_kernel(x_ref, g1_ref, b1_ref, wqkv_ref, bqkv_ref,
                    cosd_ref, sina_ref, sinb_ref, qr_ref, kr_ref, v_ref):
    x = x_ref[...]                                        # (TR, C) f32
    C = x.shape[-1]
    hd = C // NH
    half = hd // 2

    xln = _layernorm(x, g1_ref[...], b1_ref[...])
    qkv = jnp.dot(xln.astype(jnp.bfloat16), wqkv_ref[...],
                  preferred_element_type=jnp.float32) + bqkv_ref[...]   # (TR, 3C) f32

    q = qkv[:, :C]
    k = qkv[:, C:2 * C]
    v = qkv[:, 2 * C:]

    # Broadcast the (TR, hd) rope tables across the NH heads -> (TR, C).
    cosT = jnp.concatenate([cosd_ref[...]] * NH, axis=1)   # [cos  | cos ] per head
    sinA = jnp.concatenate([sina_ref[...]] * NH, axis=1)   # [-sin | 0   ] per head
    sinB = jnp.concatenate([sinb_ref[...]] * NH, axis=1)   # [ 0   | sin ] per head

    def rope(t):
        # t[p + half] at every column (cyclic); zero half of sinA kills wrap terms.
        roll_m = jnp.concatenate([t[:, half:], t[:, :half]], axis=1)
        # t[p - half] at every column (cyclic); zero half of sinB kills wrap terms.
        roll_p = jnp.concatenate([t[:, C - half:], t[:, :C - half]], axis=1)
        return t * cosT + roll_m * sinA + roll_p * sinB

    qr_ref[...] = rope(q).astype(qr_ref.dtype)   # q already pre-scaled by 1/sqrt(hd)
    kr_ref[...] = rope(k).astype(kr_ref.dtype)
    v_ref[...] = v.astype(v_ref.dtype)


# ----------------------------------------------------------------------------
# Kernel 2: flash-style causal attention + output projection + residual.
# Grid (B, q-tiles, kv-tiles); kv is the (arbitrary) reduction axis with online
# softmax state in VMEM scratch. One full-head-dim contraction per head, a
# single lane-dense (TQ, C) accumulator, and one W_O matmul at finalize.
# ----------------------------------------------------------------------------
def attn_kernel(x_ref, qr_ref, kr_ref, v_ref, wo_ref, bo_ref, o_ref,
                m_scr, l_scr, acc_scr):
    qi = pl.program_id(1)
    ki = pl.program_id(2)
    nk = pl.num_programs(2)

    TQ = qr_ref.shape[0]
    TK = kr_ref.shape[0]
    C = v_ref.shape[-1]
    hd = C // NH
    dn = (((1,), (1,)), ((), ()))        # contract last dim of both (q @ k.T, no .T)

    @pl.when(ki == 0)
    def _init():
        m_scr[...] = jnp.full(m_scr.shape, -jnp.inf, m_scr.dtype)
        l_scr[...] = jnp.zeros(l_scr.shape, l_scr.dtype)
        acc_scr[...] = jnp.zeros(acc_scr.shape, acc_scr.dtype)

    # Tile classification (TK != TQ safe):
    needs = (ki * TK) < ((qi + 1) * TQ)             # tile has >= 1 unmasked element
    full = ((ki + 1) * TK) <= (qi * TQ + 1)         # tile entirely below the diagonal

    def _update(masked):
        qr = qr_ref[...]                            # (TQ, C) bf16, head-contiguous
        kr = kr_ref[...]                            # (TK, C) bf16
        v = v_ref[...]                              # (TK, C) bf16
        if masked:
            rowg = qi * TQ + lax.broadcasted_iota(jnp.int32, (TQ, TK), 0)
            colg = ki * TK + lax.broadcasted_iota(jnp.int32, (TQ, TK), 1)
            # additive bias, built once and shared by all heads
            bias = jnp.where(rowg >= colg, 0.0, -jnp.inf).astype(jnp.float32)

        for h in range(NH):                         # static unroll over heads
            q_h = qr[:, h * hd:(h + 1) * hd]
            k_h = kr[:, h * hd:(h + 1) * hd]
            s = lax.dot_general(q_h, k_h, dn, preferred_element_type=jnp.float32)
            if masked:
                s = s + bias                        # scale already folded into q

            m_prev = m_scr[h]                       # (TQ, 1)
            m_new = jnp.maximum(m_prev, jnp.max(s, axis=-1, keepdims=True))
            alpha = jnp.exp(m_prev - m_new)
            p = jnp.exp(s - m_new)                  # (TQ, TK) f32

            l_scr[h] = alpha * l_scr[h] + jnp.sum(p, axis=-1, keepdims=True)
            acc_scr[:, h * hd:(h + 1) * hd] = (
                alpha * acc_scr[:, h * hd:(h + 1) * hd]
                + jnp.dot(p.astype(jnp.bfloat16), v[:, h * hd:(h + 1) * hd],
                          preferred_element_type=jnp.float32))
            m_scr[h] = m_new

    @pl.when(jnp.logical_and(needs, full))          # mask-free fast path
    def _unmasked():
        _update(False)

    @pl.when(jnp.logical_and(needs, jnp.logical_not(full)))   # diagonal tiles
    def _masked():
        _update(True)

    @pl.when(ki == nk - 1)
    def _finalize():
        # ki==0 always contains >=1 valid column for every row, so m/l are finite.
        inv_full = jnp.concatenate(
            [jnp.broadcast_to(pl.reciprocal(l_scr[h], approx=True), (TQ, hd))
             for h in range(NH)], axis=-1)                         # (TQ, C)
        o_bf = (acc_scr[...] * inv_full).astype(jnp.bfloat16)      # lane-dense
        y = jnp.dot(o_bf, wo_ref[...], preferred_element_type=jnp.float32)
        o_ref[...] = (x_ref[...] + y + bo_ref[...]).astype(o_ref.dtype)


# ----------------------------------------------------------------------------
# Kernel 3: ln_2 + MLP (Linear -> GELU -> Linear) + residual.
# Third grid axis streams the 4C hidden dim (panels of w1/w2); LayerNorm is
# computed once per row tile into a bf16 scratch, the second matmul accumulates
# into a (TR, C) f32 scratch, residual added at the last panel.
# ----------------------------------------------------------------------------
def mlp_kernel(x_ref, g2_ref, b2_ref, w1_ref, bm1_ref, w2_ref, bm2_ref, o_ref,
               acc_ref, xln_ref):
    j = pl.program_id(2)
    nj = pl.num_programs(2)

    @pl.when(j == 0)
    def _init():
        xln = _layernorm(x_ref[...], g2_ref[...], b2_ref[...])
        xln_ref[...] = xln.astype(xln_ref.dtype)
        acc_ref[...] = jnp.zeros(acc_ref.shape, acc_ref.dtype)

    h1 = jnp.dot(xln_ref[...], w1_ref[...],
                 preferred_element_type=jnp.float32) + bm1_ref[...]      # (TR, TH)
    gel = 0.5 * h1 * (1.0 + lax.erf(h1 * np.float32(1.0 / math.sqrt(2.0))))  # exact GELU
    acc_ref[...] += jnp.dot(gel.astype(jnp.bfloat16), w2_ref[...],
                            preferred_element_type=jnp.float32)

    @pl.when(j == nj - 1)
    def _finalize():
        o_ref[...] = (x_ref[...] + acc_ref[...] + bm2_ref[...]).astype(o_ref.dtype)


# ----------------------------------------------------------------------------
# Wrapper: weight prep (transpose, rotary column permutation + q scaling, bf16
# cast), rope tables, BlockSpecs / grids for the three pallas_calls.
# ----------------------------------------------------------------------------
def block_forward(x, params, *, block_q=256, block_kv=256, block_rows=256,
                  mlp_hidden_tile=None):
    B, T, C = x.shape
    assert C % NH == 0
    hd = C // NH
    assert hd % 2 == 0
    half = hd // 2
    TQ = min(block_q, T)
    TK = min(block_kv, T)
    TR = min(block_rows, T)
    assert T % TQ == 0 and T % TK == 0 and T % TR == 0
    H4 = 4 * C
    if mlp_hidden_tile is None:
        # stream the hidden dim only when w1/w2 are too large to keep resident (v7x)
        TH = H4 if C < 1536 else 512
    else:
        TH = min(mlp_hidden_tile, H4)
    assert H4 % TH == 0 and (TH == H4 or TH % 128 == 0)
    NJ = H4 // TH
    bf16 = jnp.bfloat16
    f32 = jnp.float32

    # ---- fold rotary even/odd de-interleave into a head-contiguous Q/K column
    #      permutation: per head -> [even comps (half) | odd comps (half)]
    perm = np.zeros((C,), np.int32)
    for h in range(NH):
        for r in range(hd):
            perm[h * hd + r] = (h * hd + 2 * r) if r < half else (h * hd + 2 * (r - half) + 1)

    q_scale = 1.0 / math.sqrt(hd)            # folded into Q weights/bias (power of 2)

    wqkv = jnp.asarray(params["w_attn"], f32).T               # (C, 3C), y = x @ W
    bqkv = jnp.asarray(params["b_attn"], f32)                 # (3C,)
    wq_p = wqkv[:, :C][:, perm] * q_scale
    wk_p = wqkv[:, C:2 * C][:, perm]
    wv = wqkv[:, 2 * C:]
    wqkv_p = jnp.concatenate([wq_p, wk_p, wv], axis=1).astype(bf16)
    bqkv_p = jnp.concatenate([bqkv[:C][perm] * q_scale, bqkv[C:2 * C][perm], bqkv[2 * C:]],
                             axis=0)[None, :].astype(f32)

    wo = jnp.asarray(params["w_o"], f32).T.astype(bf16)       # (C, C)
    bo = jnp.asarray(params["b_o"], f32)[None, :]
    w1 = jnp.asarray(params["w_mlp1"], f32).T.astype(bf16)    # (C, 4C)
    bm1 = jnp.asarray(params["b_mlp1"], f32)[None, :]
    w2 = jnp.asarray(params["w_mlp2"], f32).T.astype(bf16)    # (4C, C)
    bm2 = jnp.asarray(params["b_mlp2"], f32)[None, :]
    g1 = jnp.asarray(params["ln1_g"], f32)[None, :]
    be1 = jnp.asarray(params["ln1_b"], f32)[None, :]
    g2 = jnp.asarray(params["ln2_g"], f32)[None, :]
    be2 = jnp.asarray(params["ln2_b"], f32)[None, :]

    # ---- rotary tables (base 1000, matching the module), (T, hd) only
    inv_freq = 1.0 / (1000.0 ** (np.arange(0, hd, 2, dtype=np.float32) / hd))
    ang = np.arange(T, dtype=np.float32)[:, None] * inv_freq[None, :]     # (T, half)
    cos_h = np.cos(ang).astype(np.float32)
    sin_h = np.sin(ang).astype(np.float32)
    zero_h = np.zeros_like(sin_h)
    cosd = jnp.asarray(np.concatenate([cos_h, cos_h], axis=1))            # (T, hd)
    sina = jnp.asarray(np.concatenate([-sin_h, zero_h], axis=1))          # (T, hd)
    sinb = jnp.asarray(np.concatenate([zero_h, sin_h], axis=1))           # (T, hd)

    cp2 = pltpu.CompilerParams(dimension_semantics=("parallel", "parallel"),
                               vmem_limit_bytes=VMEM_LIMIT)
    cp3 = pltpu.CompilerParams(dimension_semantics=("parallel", "parallel", "arbitrary"),
                               vmem_limit_bytes=VMEM_LIMIT)

    # ---------------- Kernel 1: ln_1 + QKV + rotary ----------------
    ce1 = pl.CostEstimate(flops=int(2 * B * T * C * 3 * C),
                          transcendentals=0,
                          bytes_accessed=int(4 * B * T * C + 2 * 3 * C * C +
                                             3 * 2 * B * T * C))
    qr, kr, v = pl.pallas_call(
        qkv_rope_kernel,
        out_shape=(jax.ShapeDtypeStruct((B, T, C), bf16),
                   jax.ShapeDtypeStruct((B, T, C), bf16),
                   jax.ShapeDtypeStruct((B, T, C), bf16)),
        grid_spec=pltpu.PrefetchScalarGridSpec(
            num_scalar_prefetch=0,
            grid=(B, T // TR),
            in_specs=[
                pl.BlockSpec((None, TR, C), lambda b, i: (b, i, 0)),   # x
                pl.BlockSpec((1, C), lambda b, i: (0, 0)),             # ln1 gamma
                pl.BlockSpec((1, C), lambda b, i: (0, 0)),             # ln1 beta
                pl.BlockSpec((C, 3 * C), lambda b, i: (0, 0)),         # wqkv (perm, bf16)
                pl.BlockSpec((1, 3 * C), lambda b, i: (0, 0)),         # bqkv (perm)
                pl.BlockSpec((TR, hd), lambda b, i: (i, 0)),           # cos  [c|c]
                pl.BlockSpec((TR, hd), lambda b, i: (i, 0)),           # sinA [-s|0]
                pl.BlockSpec((TR, hd), lambda b, i: (i, 0)),           # sinB [0|+s]
            ],
            out_specs=[pl.BlockSpec((None, TR, C), lambda b, i: (b, i, 0))] * 3,
        ),
        compiler_params=cp2,
        cost_estimate=ce1,
    )(x, g1, be1, wqkv_p, bqkv_p, cosd, sina, sinb)

    # ---------------- Kernel 2: flash attention + W_O + residual ----------------
    # K/V index map clamps to the last *needed* kv tile so skipped upper-triangle
    # grid steps repeat the previous block index and their DMAs are elided.
    def kv_index(b, qi, ki):
        return (b, jnp.minimum(ki, ((qi + 1) * TQ - 1) // TK), 0)

    ce2 = pl.CostEstimate(flops=int(4 * B * T * T * C + 2 * B * T * C * C),
                          transcendentals=int(B * NH * T * T),
                          bytes_accessed=int(2 * 4 * B * T * C + 3 * 2 * B * T * C +
                                             2 * C * C))
    x1 = pl.pallas_call(
        attn_kernel,
        out_shape=jax.ShapeDtypeStruct((B, T, C), f32),
        grid_spec=pltpu.PrefetchScalarGridSpec(
            num_scalar_prefetch=0,
            grid=(B, T // TQ, T // TK),
            in_specs=[
                pl.BlockSpec((None, TQ, C), lambda b, qi, ki: (b, qi, 0)),  # x (residual)
                pl.BlockSpec((None, TQ, C), lambda b, qi, ki: (b, qi, 0)),  # qr
                pl.BlockSpec((None, TK, C), kv_index),                      # kr
                pl.BlockSpec((None, TK, C), kv_index),                      # v
                pl.BlockSpec((C, C), lambda b, qi, ki: (0, 0)),             # wo (bf16)
                pl.BlockSpec((1, C), lambda b, qi, ki: (0, 0)),             # bo
            ],
            out_specs=pl.BlockSpec((None, TQ, C), lambda b, qi, ki: (b, qi, 0)),
            scratch_shapes=[
                pltpu.VMEM((NH, TQ, 1), f32),     # running max m (per head)
                pltpu.VMEM((NH, TQ, 1), f32),     # running sum l (per head)
                pltpu.VMEM((TQ, C), f32),         # lane-dense weighted-V accumulator
            ],
        ),
        compiler_params=cp3,
        cost_estimate=ce2,
    )(x, qr, kr, v, wo, bo)

    # ---------------- Kernel 3: ln_2 + MLP + residual ----------------
    ce3 = pl.CostEstimate(flops=int(2 * 2 * B * T * C * 4 * C),
                          transcendentals=int(B * T * 4 * C),
                          bytes_accessed=int(2 * 4 * B * T * C +
                                             B * (T // TR) * 2 * 2 * 4 * C * C // max(NJ, 1) * NJ))
    out = pl.pallas_call(
        mlp_kernel,
        out_shape=jax.ShapeDtypeStruct((B, T, C), f32),
        grid_spec=pltpu.PrefetchScalarGridSpec(
            num_scalar_prefetch=0,
            grid=(B, T // TR, NJ),
            in_specs=[
                pl.BlockSpec((None, TR, C), lambda b, i, j: (b, i, 0)),   # x1
                pl.BlockSpec((1, C), lambda b, i, j: (0, 0)),             # ln2 gamma
                pl.BlockSpec((1, C), lambda b, i, j: (0, 0)),             # ln2 beta
                pl.BlockSpec((C, TH), lambda b, i, j: (0, j)),            # w1 panel (bf16)
                pl.BlockSpec((1, TH), lambda b, i, j: (0, j)),            # b1 panel
                pl.BlockSpec((TH, C), lambda b, i, j: (j, 0)),            # w2 panel (bf16)
                pl.BlockSpec((1, C), lambda b, i, j: (0, 0)),             # b2
            ],
            out_specs=pl.BlockSpec((None, TR, C), lambda b, i, j: (b, i, 0)),
            scratch_shapes=[
                pltpu.VMEM((TR, C), f32),     # second-matmul accumulator
                pltpu.VMEM((TR, C), bf16),    # ln_2(x) cached across hidden panels
            ],
        ),
        compiler_params=cp3,
        cost_estimate=ce3,
    )(x1, g2, be2, w1, bm1, w2, bm2)

    return out


# ----------------------------------------------------------------------------
# Pure-JAX f32 reference mirroring the PyTorch Block forward (for validation)
# ----------------------------------------------------------------------------
def ref_block(x, params):
    B, T, C = x.shape
    hd = C // NH

    h1 = _layernorm(x, params["ln1_g"], params["ln1_b"])
    qkv = h1 @ params["w_attn"].T + params["b_attn"]
    q, k, v = jnp.split(qkv, 3, axis=2)
    q = q.reshape(B, T, NH, hd).transpose(0, 2, 1, 3)
    k = k.reshape(B, T, NH, hd).transpose(0, 2, 1, 3)
    v = v.reshape(B, T, NH, hd).transpose(0, 2, 1, 3)

    inv_freq = 1.0 / (1000.0 ** (jnp.arange(0, hd, 2, dtype=jnp.float32) / hd))
    ang = jnp.arange(T, dtype=jnp.float32)[:, None] * inv_freq[None, :]
    sin_, cos_ = jnp.sin(ang)[None, None], jnp.cos(ang)[None, None]
    q1, q2 = q[..., ::2], q[..., 1::2]
    k1, k2 = k[..., ::2], k[..., 1::2]
    q_r = jnp.concatenate([q1 * cos_ - q2 * sin_, q1 * sin_ + q2 * cos_], -1)
    k_r = jnp.concatenate([k1 * cos_ - k2 * sin_, k1 * sin_ + k2 * cos_], -1)

    att = (q_r @ jnp.swapaxes(k_r, -1, -2)) / math.sqrt(hd)
    mask = jnp.tril(jnp.ones((T, T)))[None, None]
    att = jnp.where(mask < 1, -jnp.inf, att)
    att = jax.nn.softmax(att, axis=-1)
    y = (att @ v).transpose(0, 2, 1, 3).reshape(B, T, C)
    y = y @ params["w_o"].T + params["b_o"]
    x = x + y

    h2 = _layernorm(x, params["ln2_g"], params["ln2_b"])
    m = h2 @ params["w_mlp1"].T + params["b_mlp1"]
    m = 0.5 * m * (1.0 + lax.erf(m / math.sqrt(2.0)))
    m = m @ params["w_mlp2"].T + params["b_mlp2"]
    return x + m


# ----------------------------------------------------------------------------
if __name__ == "__main__":
    # small but layout-friendly shapes: n_embd=128, n_head=8 (head_dim=16), T=32.
    B, T, C = 2, 32, 128

    key = jax.random.PRNGKey(0)
    ks = jax.random.split(key, 12)
    init = lambda k, shp, s=0.02: s * jax.random.normal(k, shp, dtype=jnp.float32)

    params = {
        "w_attn": init(ks[0], (3 * C, C)),
        "b_attn": init(ks[1], (3 * C,)),
        "w_o":    init(ks[2], (C, C)),
        "b_o":    init(ks[3], (C,)),
        "ln1_g":  jnp.ones((C,), jnp.float32),
        "ln1_b":  jnp.zeros((C,), jnp.float32),
        "ln2_g":  jnp.ones((C,), jnp.float32),
        "ln2_b":  jnp.zeros((C,), jnp.float32),
        "w_mlp1": init(ks[4], (4 * C, C)),
        "b_mlp1": init(ks[5], (4 * C,)),
        "w_mlp2": init(ks[6], (C, 4 * C)),
        "b_mlp2": init(ks[7], (C,)),
    }
    x = jax.random.normal(ks[8], (B, T, C), dtype=jnp.float32)

    ref = ref_block(x, params)

    # (a) default tiling: tiles clamp to T (single attention tile, whole 4C resident)
    out_a = block_forward(x, params)
    jax.block_until_ready(out_a)

    # (b) small tiles: exercises the online softmax across KV tiles, the causal
    #     tile-skip + clamped K/V prefetch, and the 4C-streaming MLP path.
    out_b = block_forward(x, params, block_q=16, block_kv=16, block_rows=16,
                          mlp_hidden_tile=128)
    jax.block_until_ready(out_b)

    # bf16 MXU operands + approx reciprocal => bf16-appropriate tolerance vs f32 ref
    for out in (out_a, out_b):
        assert np.allclose(np.asarray(out), np.asarray(ref), rtol=2e-2, atol=2e-2), \
            "Pallas output does not match JAX reference"
    print("KERNEL_OK")
</pallas_src>

<mosaic_0001>
module attributes {stable_mosaic.version = 11 : i64} {
  func.func @qkv_rope_kernel(%arg0: i32, %arg1: i32, %arg2: memref<1x32x128xf32, #tpu.memory_space<vmem>>, %arg3: memref<1x128xf32, #tpu.memory_space<vmem>>, %arg4: memref<1x128xf32, #tpu.memory_space<vmem>>, %arg5: memref<128x384xbf16, #tpu.memory_space<vmem>>, %arg6: memref<1x384xf32, #tpu.memory_space<vmem>>, %arg7: memref<32x16xf32, #tpu.memory_space<vmem>>, %arg8: memref<32x16xf32, #tpu.memory_space<vmem>>, %arg9: memref<32x16xf32, #tpu.memory_space<vmem>>, %arg10: memref<1x32x128xbf16, #tpu.memory_space<vmem>>, %arg11: memref<1x32x128xbf16, #tpu.memory_space<vmem>>, %arg12: memref<1x32x128xbf16, #tpu.memory_space<vmem>>) attributes {dimension_semantics = [#tpu.dimension_semantics<parallel>, #tpu.dimension_semantics<parallel>], iteration_bounds = array<i64: 2, 1>, scalar_prefetch = 0 : i64, scratch_operands = 0 : i64, tpu.core_type = #tpu.core_type<tc>, window_params = [{transform_indices = @transform_0, window_bounds = array<i64: 1, 32, 128>}, {pipeline_mode = #tpu.pipeline_mode<synchronous>, transform_indices = @transform_1, window_bounds = array<i64: 1, 128>}, {pipeline_mode = #tpu.pipeline_mode<synchronous>, transform_indices = @transform_2, window_bounds = array<i64: 1, 128>}, {pipeline_mode = #tpu.pipeline_mode<synchronous>, transform_indices = @transform_3, window_bounds = array<i64: 128, 384>}, {pipeline_mode = #tpu.pipeline_mode<synchronous>, transform_indices = @transform_4, window_bounds = array<i64: 1, 384>}, {transform_indices = @transform_5, window_bounds = array<i64: 32, 16>}, {transform_indices = @transform_6, window_bounds = array<i64: 32, 16>}, {transform_indices = @transform_7, window_bounds = array<i64: 32, 16>}, {transform_indices = @transform_8, window_bounds = array<i64: 1, 32, 128>}, {transform_indices = @transform_9, window_bounds = array<i64: 1, 32, 128>}, {transform_indices = @transform_10, window_bounds = array<i64: 1, 32, 128>}]} {
    %c0 = arith.constant 0 : index
    %c0_0 = arith.constant 0 : index
    %c0_1 = arith.constant 0 : index
    %0 = vector.load %arg2[%c0, %c0_0, %c0_1] : memref<1x32x128xf32, #tpu.memory_space<vmem>>, vector<1x32x128xf32>
    %1 = vector.shape_cast %0 : vector<1x32x128xf32> to vector<32x128xf32>
    %c0_2 = arith.constant 0 : index
    %c0_3 = arith.constant 0 : index
    %2 = vector.load %arg3[%c0_2, %c0_3] : memref<1x128xf32, #tpu.memory_space<vmem>>, vector<1x128xf32>
    %c0_4 = arith.constant 0 : index
    %c0_5 = arith.constant 0 : index
    %3 = vector.load %arg4[%c0_4, %c0_5] : memref<1x128xf32, #tpu.memory_space<vmem>>, vector<1x128xf32>
    %cst = arith.constant dense<0.000000e+00> : vector<32xf32>
    %4 = vector.multi_reduction <add>, %1, %cst [1] : vector<32x128xf32> to vector<32xf32>
    %5 = vector.shape_cast %4 : vector<32xf32> to vector<32x1xf32>
    %cst_6 = arith.constant 1.280000e+02 : f32
    %6 = vector.broadcast %cst_6 : f32 to vector<32x1xf32>
    %7 = arith.divf %5, %6 : vector<32x1xf32>
    %8 = vector.broadcast %7 : vector<32x1xf32> to vector<32x128xf32>
    %9 = arith.subf %1, %8 : vector<32x128xf32>
    %10 = arith.mulf %9, %9 : vector<32x128xf32>
    %cst_7 = arith.constant dense<0.000000e+00> : vector<32xf32>
    %11 = vector.multi_reduction <add>, %10, %cst_7 [1] : vector<32x128xf32> to vector<32xf32>
    %12 = vector.shape_cast %11 : vector<32xf32> to vector<32x1xf32>
    %cst_8 = arith.constant 1.280000e+02 : f32
    %13 = vector.broadcast %cst_8 : f32 to vector<32x1xf32>
    %14 = arith.divf %12, %13 : vector<32x1xf32>
    %15 = vector.broadcast %7 : vector<32x1xf32> to vector<32x128xf32>
    %16 = arith.subf %1, %15 : vector<32x128xf32>
    %cst_9 = arith.constant 9.99999974E-6 : f32
    %17 = vector.broadcast %cst_9 : f32 to vector<32x1xf32>
    %18 = arith.addf %14, %17 : vector<32x1xf32>
    %19 = math.rsqrt %18 : vector<32x1xf32>
    %20 = vector.broadcast %19 : vector<32x1xf32> to vector<32x128xf32>
    %21 = arith.mulf %16, %20 : vector<32x128xf32>
    %22 = vector.broadcast %2 : vector<1x128xf32> to vector<32x128xf32>
    %23 = arith.mulf %21, %22 : vector<32x128xf32>
    %24 = vector.broadcast %3 : vector<1x128xf32> to vector<32x128xf32>
    %25 = arith.addf %23, %24 : vector<32x128xf32>
    %26 = arith.truncf %25 : vector<32x128xf32> to vector<32x128xbf16>
    %c0_10 = arith.constant 0 : index
    %c0_11 = arith.constant 0 : index
    %27 = vector.load %arg5[%c0_10, %c0_11] : memref<128x384xbf16, #tpu.memory_space<vmem>>, vector<128x384xbf16>
    %cst_12 = arith.constant dense<0.000000e+00> : vector<32x384xf32>
    %28 = tpu.matmul %26, %27, %cst_12 {dimension_numbers = #tpu.dot_dimension_numbers<[1], [0], [0], [1], [0, 0, 1, 1], [], []>} : vector<32x128xbf16>, vector<128x384xbf16>, vector<32x384xf32> -> vector<32x384xf32>
    %c0_13 = arith.constant 0 : index
    %c0_14 = arith.constant 0 : index
    %29 = vector.load %arg6[%c0_13, %c0_14] : memref<1x384xf32, #tpu.memory_space<vmem>>, vector<1x384xf32>
    %30 = vector.broadcast %29 : vector<1x384xf32> to vector<32x384xf32>
    %31 = arith.addf %28, %30 : vector<32x384xf32>
    %32 = vector.extract_strided_slice %31 {offsets = [0, 0], sizes = [32, 128], strides = [1, 1]} : vector<32x384xf32> to vector<32x128xf32>
    %33 = vector.extract_strided_slice %31 {offsets = [0, 128], sizes = [32, 128], strides = [1, 1]} : vector<32x384xf32> to vector<32x128xf32>
    %34 = vector.extract_strided_slice %31 {offsets = [0, 256], sizes = [32, 128], strides = [1, 1]} : vector<32x384xf32> to vector<32x128xf32>
    %c0_15 = arith.constant 0 : index
    %c0_16 = arith.constant 0 : index
    %35 = vector.load %arg7[%c0_15, %c0_16] : memref<32x16xf32, #tpu.memory_space<vmem>>, vector<32x16xf32>
    %36 = tpu.concatenate %35, %35, %35, %35, %35, %35, %35, %35 in 1 : vector<32x16xf32>, vector<32x16xf32>, vector<32x16xf32>, vector<32x16xf32>, vector<32x16xf32>, vector<32x16xf32>, vector<32x16xf32>, vector<32x16xf32> -> vector<32x128xf32>
    %c0_17 = arith.constant 0 : index
    %c0_18 = arith.constant 0 : index
    %37 = vector.load %arg8[%c0_17, %c0_18] : memref<32x16xf32, #tpu.memory_space<vmem>>, vector<32x16xf32>
    %38 = tpu.concatenate %37, %37, %37, %37, %37, %37, %37, %37 in 1 : vector<32x16xf32>, vector<32x16xf32>, vector<32x16xf32>, vector<32x16xf32>, vector<32x16xf32>, vector<32x16xf32>, vector<32x16xf32>, vector<32x16xf32> -> vector<32x128xf32>
    %c0_19 = arith.constant 0 : index
    %c0_20 = arith.constant 0 : index
    %39 = vector.load %arg9[%c0_19, %c0_20] : memref<32x16xf32, #tpu.memory_space<vmem>>, vector<32x16xf32>
    %40 = tpu.concatenate %39, %39, %39, %39, %39, %39, %39, %39 in 1 : vector<32x16xf32>, vector<32x16xf32>, vector<32x16xf32>, vector<32x16xf32>, vector<32x16xf32>, vector<32x16xf32>, vector<32x16xf32>, vector<32x16xf32> -> vector<32x128xf32>
    %41 = vector.extract_strided_slice %32 {offsets = [0, 8], sizes = [32, 120], strides = [1, 1]} : vector<32x128xf32> to vector<32x120xf32>
    %42 = vector.extract_strided_slice %32 {offsets = [0, 0], sizes = [32, 8], strides = [1, 1]} : vector<32x128xf32> to vector<32x8xf32>
    %43 = tpu.concatenate %41, %42 in 1 : vector<32x120xf32>, vector<32x8xf32> -> vector<32x128xf32>
    %44 = vector.extract_strided_slice %32 {offsets = [0, 120], sizes = [32, 8], strides = [1, 1]} : vector<32x128xf32> to vector<32x8xf32>
    %45 = vector.extract_strided_slice %32 {offsets = [0, 0], sizes = [32, 120], strides = [1, 1]} : vector<32x128xf32> to vector<32x120xf32>
    %46 = tpu.concatenate %44, %45 in 1 : vector<32x8xf32>, vector<32x120xf32> -> vector<32x128xf32>
    %47 = arith.mulf %32, %36 : vector<32x128xf32>
    %48 = arith.mulf %43, %38 : vector<32x128xf32>
    %49 = arith.addf %47, %48 : vector<32x128xf32>
    %50 = arith.mulf %46, %40 : vector<32x128xf32>
    %51 = arith.addf %49, %50 : vector<32x128xf32>
    %52 = arith.truncf %51 : vector<32x128xf32> to vector<32x128xbf16>
    %c0_21 = arith.constant 0 : index
    %c0_22 = arith.constant 0 : index
    %c0_23 = arith.constant 0 : index
    %53 = vector.load %arg10[%c0_21, %c0_22, %c0_23] : memref<1x32x128xbf16, #tpu.memory_space<vmem>>, vector<1x32x128xbf16>
    %54 = vector.shape_cast %53 : vector<1x32x128xbf16> to vector<32x128xbf16>
    %55 = vector.shape_cast %52 : vector<32x128xbf16> to vector<1x32x128xbf16>
    tpu.vector_store %arg10[%c0_21, %c0_22, %c0_23], %55 {strides = array<i32>} : memref<1x32x128xbf16, #tpu.memory_space<vmem>>, vector<1x32x128xbf16>,
    %56 = vector.extract_strided_slice %33 {offsets = [0, 8], sizes = [32, 120], strides = [1, 1]} : vector<32x128xf32> to vector<32x120xf32>
    %57 = vector.extract_strided_slice %33 {offsets = [0, 0], sizes = [32, 8], strides = [1, 1]} : vector<32x128xf32> to vector<32x8xf32>
    %58 = tpu.concatenate %56, %57 in 1 : vector<32x120xf32>, vector<32x8xf32> -> vector<32x128xf32>
    %59 = vector.extract_strided_slice %33 {offsets = [0, 120], sizes = [32, 8], strides = [1, 1]} : vector<32x128xf32> to vector<32x8xf32>
    %60 = vector.extract_strided_slice %33 {offsets = [0, 0], sizes = [32, 120], strides = [1, 1]} : vector<32x128xf32> to vector<32x120xf32>
    %61 = tpu.concatenate %59, %60 in 1 : vector<32x8xf32>, vector<32x120xf32> -> vector<32x128xf32>
    %62 = arith.mulf %33, %36 : vector<32x128xf32>
    %63 = arith.mulf %58, %38 : vector<32x128xf32>
    %64 = arith.addf %62, %63 : vector<32x128xf32>
    %65 = arith.mulf %61, %40 : vector<32x128xf32>
    %66 = arith.addf %64, %65 : vector<32x128xf32>
    %67 = arith.truncf %66 : vector<32x128xf32> to vector<32x128xbf16>
    %c0_24 = arith.constant 0 : index
    %c0_25 = arith.constant 0 : index
    %c0_26 = arith.constant 0 : index
    %68 = vector.load %arg11[%c0_24, %c0_25, %c0_26] : memref<1x32x128xbf16, #tpu.memory_space<vmem>>, vector<1x32x128xbf16>
    %69 = vector.shape_cast %68 : vector<1x32x128xbf16> to vector<32x128xbf16>
    %70 = vector.shape_cast %67 : vector<32x128xbf16> to vector<1x32x128xbf16>
    tpu.vector_store %arg11[%c0_24, %c0_25, %c0_26], %70 {strides = array<i32>} : memref<1x32x128xbf16, #tpu.memory_space<vmem>>, vector<1x32x128xbf16>,
    %71 = arith.truncf %34 : vector<32x128xf32> to vector<32x128xbf16>
    %c0_27 = arith.constant 0 : index
    %c0_28 = arith.constant 0 : index
    %c0_29 = arith.constant 0 : index
    %72 = vector.load %arg12[%c0_27, %c0_28, %c0_29] : memref<1x32x128xbf16, #tpu.memory_space<vmem>>, vector<1x32x128xbf16>
    %73 = vector.shape_cast %72 : vector<1x32x128xbf16> to vector<32x128xbf16>
    %74 = vector.shape_cast %71 : vector<32x128xbf16> to vector<1x32x128xbf16>
    tpu.vector_store %arg12[%c0_27, %c0_28, %c0_29], %74 {strides = array<i32>} : memref<1x32x128xbf16, #tpu.memory_space<vmem>>, vector<1x32x128xbf16>,
    return
  }
  func.func @transform_0(%arg0: i32, %arg1: i32) -> (i32, i32, i32) {
    %c0_i32 = arith.constant 0 : i32
    %c0_i32_0 = arith.constant 0 : i32
    return %arg0, %arg1, %c0_i32 : i32, i32, i32
  }
  func.func @transform_1(%arg0: i32, %arg1: i32) -> (i32, i32) {
    %c0_i32 = arith.constant 0 : i32
    %c0_i32_0 = arith.constant 0 : i32
    %c0_i32_1 = arith.constant 0 : i32
    return %c0_i32, %c0_i32_0 : i32, i32
  }
  func.func @transform_2(%arg0: i32, %arg1: i32) -> (i32, i32) {
    %c0_i32 = arith.constant 0 : i32
    %c0_i32_0 = arith.constant 0 : i32
    %c0_i32_1 = arith.constant 0 : i32
    return %c0_i32, %c0_i32_0 : i32, i32
  }
  func.func @transform_3(%arg0: i32, %arg1: i32) -> (i32, i32) {
    %c0_i32 = arith.constant 0 : i32
    %c0_i32_0 = arith.constant 0 : i32
    %c0_i32_1 = arith.constant 0 : i32
    return %c0_i32, %c0_i32_0 : i32, i32
  }
  func.func @transform_4(%arg0: i32, %arg1: i32) -> (i32, i32) {
    %c0_i32 = arith.constant 0 : i32
    %c0_i32_0 = arith.constant 0 : i32
    %c0_i32_1 = arith.constant 0 : i32
    return %c0_i32, %c0_i32_0 : i32, i32
  }
  func.func @transform_5(%arg0: i32, %arg1: i32) -> (i32, i32) {
    %c0_i32 = arith.constant 0 : i32
    %c0_i32_0 = arith.constant 0 : i32
    return %arg1, %c0_i32 : i32, i32
  }
  func.func @transform_6(%arg0: i32, %arg1: i32) -> (i32, i32) {
    %c0_i32 = arith.constant 0 : i32
    %c0_i32_0 = arith.constant 0 : i32
    return %arg1, %c0_i32 : i32, i32
  }
  func.func @transform_7(%arg0: i32, %arg1: i32) -> (i32, i32) {
    %c0_i32 = arith.constant 0 : i32
    %c0_i32_0 = arith.constant 0 : i32
    return %arg1, %c0_i32 : i32, i32
  }
  func.func @transform_8(%arg0: i32, %arg1: i32) -> (i32, i32, i32) {
    %c0_i32 = arith.constant 0 : i32
    %c0_i32_0 = arith.constant 0 : i32
    return %arg0, %arg1, %c0_i32 : i32, i32, i32
  }
  func.func @transform_9(%arg0: i32, %arg1: i32) -> (i32, i32, i32) {
    %c0_i32 = arith.constant 0 : i32
    %c0_i32_0 = arith.constant 0 : i32
    return %arg0, %arg1, %c0_i32 : i32, i32, i32
  }
  func.func @transform_10(%arg0: i32, %arg1: i32) -> (i32, i32, i32) {
    %c0_i32 = arith.constant 0 : i32
    %c0_i32_0 = arith.constant 0 : i32
    return %arg0, %arg1, %c0_i32 : i32, i32, i32
  }
}

</mosaic_0001>

<llo_original>
// kernel: tpu_custom_call.1
$region0: #{tpu_custom_call.1}
  #allocation0 [shape = 'u32[]', space=smem, size = 0x4, offset = 0x4, fixed_abs, tag = 'smem constant byte address 0x4 - core index']
  #allocation1 [shape = 'u32[72,128]{1,0:T(1,128)}', space=vmem, size = 0x9000, scoped, tag = 'internal scratch']
  %s0 = inlined_call_operand.vmem [shape: f32[2,32,128], index: 0, kind: input, shape index: {}]
  %s1 = inlined_call_operand.vmem [shape: f32[1,128], index: 1, kind: input, shape index: {}]
  %s2 = inlined_call_operand.vmem [shape: f32[1,128], index: 2, kind: input, shape index: {}]
  %s3 = inlined_call_operand.hbm [shape: bf16[128,384], index: 3, kind: input, shape index: {}]
  %s4 = inlined_call_operand.vmem [shape: f32[1,384], index: 4, kind: input, shape index: {}]
  %s5 = inlined_call_operand.vmem [shape: f32[32,16], index: 5, kind: input, shape index: {}]
  %s6 = inlined_call_operand.vmem [shape: f32[32,16], index: 6, kind: input, shape index: {}]
  %s7 = inlined_call_operand.vmem [shape: f32[32,16], index: 7, kind: input, shape index: {}]
  %s8 = inlined_call_operand.hbm [shape: bf16[2,32,128], index: 8, kind: output, shape index: {0}]
  %s9 = inlined_call_operand.hbm [shape: bf16[2,32,128], index: 9, kind: output, shape index: {1}]
  %s10 = inlined_call_operand.hbm [shape: bf16[2,32,128], index: 10, kind: output, shape index: {2}]
  %11 = xla_tuple %s8, %s9, %s10
  %s12 = sld [smem:[#allocation0]]
  $region85: #{tpu_custom_call.1} parent=0
    _
  %s14 = ssub.s32 1, %s12
  %s15 = scalar_select 0, %s14, %s12
  $region1: #{tpu_custom_call.1} parent=0
    #allocation2 [shape = 'u8[98304]{0}', space=vmem, size = 0x18000, scoped, tag = 'input window, operand 3, single buffered']
    #allocation3 [shape = 's32[2]{0}', space=sflag, size = 0x8, scoped, tag = 'scoped memory for tpu_custom_call.1']
    #allocation4 [shape = 's32[2]{0}', space=sflag, size = 0x8, scoped, tag = 'scoped memory for tpu_custom_call.1']
    #allocation5 [shape = 'u8[16384]{0}', space=vmem, size = 0x4000, scoped, tag = 'output window, operand 0']
    #allocation6 [shape = 'u8[16384]{0}', space=vmem, size = 0x4000, scoped, tag = 'output window, operand 1']
    #allocation7 [shape = 's32[2]{0}', space=sflag, size = 0x8, scoped, tag = 'scoped memory for tpu_custom_call.1']
    #allocation8 [shape = 'u8[16384]{0}', space=vmem, size = 0x4000, scoped, tag = 'output window, operand 2']
    %16 = vsyncpa [#allocation3], 0
    %17 = vsyncpa [#allocation4], 0
    %s18 = scalar_lea.sflag [#allocation4], 1
    %19 = vsyncpa %s18, 0
    %20 = vsyncpa [#allocation7], 0
    %s21 = scalar_lea.sflag [#allocation7], 1
    %22 = vsyncpa %s21, 0
    loop: start=0, step=1, limit=4
    $region2: #{tpu_custom_call.1} parent=1 // loop_pre_header
      _
    $region3: #{tpu_custom_call.1} parent=1 // loop_header
      %s24 = sphi 0, %s28
      %p25 = scmp.ge.s32.totalorder %s24, 4
      %s31 = sphi 0, %s43
      %s32 = sphi 0, %s39
      %s33 = sphi 0, %s31
      %s34 = sphi 0, %s32
      %s35 = sphi 0, %s33
      %s36 = sphi 0, %s34
      %s48 = sphi 0, %s50
      %s51 = sphi 0, %s48
      %s52 = sphi 0, %s51
      %s68 = sphi 0, %s52
      %s72 = sphi 0, %s72
      %s74 = sphi 0, %s72
      %s75 = sphi 0, %s74
      %s89 = sphi 0, %s75
      %s93 = sphi 0, %s93
      %s95 = sphi 0, %s93
      %s96 = sphi 0, %s95
      %s110 = sphi 0, %s96
      %s114 = sphi 0, %s114
      %s116 = sphi 0, %s114
      %s117 = sphi 0, %s116
      %s131 = sphi 0, %s117
      %s135 = sphi 0, %s135
      %s137 = sphi 0, %s135
      %s138 = sphi 0, %s137
      %s152 = sphi 0, %s138
      %s158 = sphi 0, %s160
      %s161 = sphi 0, %s158
      %s162 = sphi 0, %s161
      %s178 = sphi 0, %s162
      %s184 = sphi 0, %s186
      %s187 = sphi 0, %s184
      %s188 = sphi 0, %s187
      %s204 = sphi 0, %s188
      %s210 = sphi 0, %s212
      %s213 = sphi 0, %s210
      %s214 = sphi 0, %s213
      %s230 = sphi 0, %s214
      %s238 = sphi 0, %s240
      %s241 = sphi 0, %s238
      %s242 = sphi 0, %s241
      %s258 = sphi 0, %s242
      %s266 = sphi 0, %s268
      %s269 = sphi 0, %s266
      %s270 = sphi 0, %s269
      %s286 = sphi 0, %s270
      %s294 = sphi 0, %s296
      %s297 = sphi 0, %s294
      %s298 = sphi 0, %s297
      %s314 = sphi 0, %s298
    $region4: #{tpu_custom_call.1} parent=1 // loop_header_branch
      %27 = sbr.rel (%p25) target = $region8
    $region5: #{tpu_custom_call.1} parent=1 // loop_body
      %s29 = ssub.s32 %s24, 1
      %s30 = ssub.s32 %s24, 2
      %s37 = sadd.s32 1, %s32
      %p38 = scmp.ge.s32.totalorder %s37, 1
      %s39 = scalar_select %p38, 0, %s37
      %s40 = sadd.s32 1, %s31
      %s41 = scalar_select %p38, %s40, %s31
      %p42 = scmp.ge.s32.totalorder %s41, 2
      %s43 = scalar_select %p42, 0, %s41
      %s44 = ssub.s32 %s31, %s43
      %s45 = ssub.s32 %s32, %s39
      %s46 = sor.u32 %s44, %s45
      %p47 = scmp.eq.s32.totalorder %s46, 0
      %s49 = sadd.s32 %s48, 1
      %s50 = scalar_select %p47, %s48, %s49
      %p53 = pneg %p47
      %p54 = scmp.eq.s32.totalorder %s24, 1
      %p55 = por %p53, %p54
      %p56 = scmp.ne.s32.totalorder %s48, %s51
      %p57 = scmp.eq.s32.totalorder %s24, 0
      %p58 = por %p56, %p57
      %p59 = scmp.ne.s32.totalorder %s48, %s51
      %p60 = scmp.eq.s32.totalorder %s29, 1
      %p61 = por %p59, %p60
      %p62 = scmp.ne.s32.totalorder %s51, %s52
      %p63 = scmp.eq.s32.totalorder %s29, 0
      %p64 = por %p62, %p63
      %p65 = scmp.ne.s32.totalorder %s51, %s52
      %p66 = scmp.eq.s32.totalorder %s30, 1
      %p67 = por %p65, %p66
      %p69 = scmp.ne.s32.totalorder %s52, %s68
      %p70 = scmp.eq.s32.totalorder %s30, 0
      %p71 = por %p69, %p70
      %s73 = sadd.s32 %s72, 1
      %p76 = scmp.eq.s32.totalorder %s24, 1
      %p77 = scmp.ne.s32.totalorder %s72, %s74
      %p78 = scmp.eq.s32.totalorder %s24, 0
      %p79 = por %p77, %p78
      %p80 = scmp.ne.s32.totalorder %s72, %s74
      %p81 = scmp.eq.s32.totalorder %s29, 1
      %p82 = por %p80, %p81
      %p83 = scmp.ne.s32.totalorder %s74, %s75
      %p84 = scmp.eq.s32.totalorder %s29, 0
      %p85 = por %p83, %p84
      %p86 = scmp.ne.s32.totalorder %s74, %s75
      %p87 = scmp.eq.s32.totalorder %s30, 1
      %p88 = por %p86, %p87
      %p90 = scmp.ne.s32.totalorder %s75, %s89
      %p91 = scmp.eq.s32.totalorder %s30, 0
      %p92 = por %p90, %p91
      %s94 = sadd.s32 %s93, 1
      %p97 = scmp.eq.s32.totalorder %s24, 1
      %p98 = scmp.ne.s32.totalorder %s93, %s95
      %p99 = scmp.eq.s32.totalorder %s24, 0
      %p100 = por %p98, %p99
      %p101 = scmp.ne.s32.totalorder %s93, %s95
      %p102 = scmp.eq.s32.totalorder %s29, 1
      %p103 = por %p101, %p102
      %p104 = scmp.ne.s32.totalorder %s95, %s96
      %p105 = scmp.eq.s32.totalorder %s29, 0
      %p106 = por %p104, %p105
      %p107 = scmp.ne.s32.totalorder %s95, %s96
      %p108 = scmp.eq.s32.totalorder %s30, 1
      %p109 = por %p107, %p108
      %p111 = scmp.ne.s32.totalorder %s96, %s110
      %p112 = scmp.eq.s32.totalorder %s30, 0
      %p113 = por %p111, %p112
      %s115 = sadd.s32 %s114, 1
      %p118 = scmp.eq.s32.totalorder %s24, 1
      %p119 = scmp.ne.s32.totalorder %s114, %s116
      %p120 = scmp.eq.s32.totalorder %s24, 0
      %p121 = por %p119, %p120
      %p122 = scmp.ne.s32.totalorder %s114, %s116
      %p123 = scmp.eq.s32.totalorder %s29, 1
      %p124 = por %p122, %p123
      %p125 = scmp.ne.s32.totalorder %s116, %s117
      %p126 = scmp.eq.s32.totalorder %s29, 0
      %p127 = por %p125, %p126
      %p128 = scmp.ne.s32.totalorder %s116, %s117
      %p129 = scmp.eq.s32.totalorder %s30, 1
      %p130 = por %p128, %p129
      %p132 = scmp.ne.s32.totalorder %s117, %s131
      %p133 = scmp.eq.s32.totalorder %s30, 0
      %p134 = por %p132, %p133
      %s136 = sadd.s32 %s135, 1
      %p139 = scmp.eq.s32.totalorder %s24, 1
      %p140 = scmp.ne.s32.totalorder %s135, %s137
      %p141 = scmp.eq.s32.totalorder %s24, 0
      %p142 = por %p140, %p141
      %p143 = scmp.ne.s32.totalorder %s135, %s137
      %p144 = scmp.eq.s32.totalorder %s29, 1
      %p145 = por %p143, %p144
      %p146 = scmp.ne.s32.totalorder %s137, %s138
      %p147 = scmp.eq.s32.totalorder %s29, 0
      %p148 = por %p146, %p147
      %p149 = scmp.ne.s32.totalorder %s137, %s138
      %p150 = scmp.eq.s32.totalorder %s30, 1
      %p151 = por %p149, %p150
      %p153 = scmp.ne.s32.totalorder %s138, %s152
      %p154 = scmp.eq.s32.totalorder %s30, 0
      %p155 = por %p153, %p154
      %s156 = ssub.s32 %s32, %s39
      %p157 = scmp.eq.s32.totalorder %s156, 0
      %s159 = sadd.s32 %s158, 1
      %s160 = scalar_select %p157, %s158, %s159
      %p163 = pneg %p157
      %p164 = scmp.eq.s32.totalorder %s24, 1
      %p165 = por %p163, %p164
      %p166 = scmp.ne.s32.totalorder %s158, %s161
      %p167 = scmp.eq.s32.totalorder %s24, 0
      %p168 = por %p166, %p167
      %p169 = scmp.ne.s32.totalorder %s158, %s161
      %p170 = scmp.eq.s32.totalorder %s29, 1
      %p171 = por %p169, %p170
      %p172 = scmp.ne.s32.totalorder %s161, %s162
      %p173 = scmp.eq.s32.totalorder %s29, 0
      %p174 = por %p172, %p173
      %p175 = scmp.ne.s32.totalorder %s161, %s162
      %p176 = scmp.eq.s32.totalorder %s30, 1
      %p177 = por %p175, %p176
      %p179 = scmp.ne.s32.totalorder %s162, %s178
      %p180 = scmp.eq.s32.totalorder %s30, 0
      %p181 = por %p179, %p180
      %s182 = ssub.s32 %s32, %s39
      %p183 = scmp.eq.s32.totalorder %s182, 0
      %s185 = sadd.s32 %s184, 1
      %s186 = scalar_select %p183, %s184, %s185
      %p189 = pneg %p183
      %p190 = scmp.eq.s32.totalorder %s24, 1
      %p191 = por %p189, %p190
      %p192 = scmp.ne.s32.totalorder %s184, %s187
      %p193 = scmp.eq.s32.totalorder %s24, 0
      %p194 = por %p192, %p193
      %p195 = scmp.ne.s32.totalorder %s184, %s187
      %p196 = scmp.eq.s32.totalorder %s29, 1
      %p197 = por %p195, %p196
      %p198 = scmp.ne.s32.totalorder %s187, %s188
      %p199 = scmp.eq.s32.totalorder %s29, 0
      %p200 = por %p198, %p199
      %p201 = scmp.ne.s32.totalorder %s187, %s188
      %p202 = scmp.eq.s32.totalorder %s30, 1
      %p203 = por %p201, %p202
      %p205 = scmp.ne.s32.totalorder %s188, %s204
      %p206 = scmp.eq.s32.totalorder %s30, 0
      %p207 = por %p205, %p206
      %s208 = ssub.s32 %s32, %s39
      %p209 = scmp.eq.s32.totalorder %s208, 0
      %s211 = sadd.s32 %s210, 1
      %s212 = scalar_select %p209, %s210, %s211
      %p215 = pneg %p209
      %p216 = scmp.eq.s32.totalorder %s24, 1
      %p217 = por %p215, %p216
      %p218 = scmp.ne.s32.totalorder %s210, %s213
      %p219 = scmp.eq.s32.totalorder %s24, 0
      %p220 = por %p218, %p219
      %p221 = scmp.ne.s32.totalorder %s210, %s213
      %p222 = scmp.eq.s32.totalorder %s29, 1
      %p223 = por %p221, %p222
      %p224 = scmp.ne.s32.totalorder %s213, %s214
      %p225 = scmp.eq.s32.totalorder %s29, 0
      %p226 = por %p224, %p225
      %p227 = scmp.ne.s32.totalorder %s213, %s214
      %p228 = scmp.eq.s32.totalorder %s30, 1
      %p229 = por %p227, %p228
      %p231 = scmp.ne.s32.totalorder %s214, %s230
      %p232 = scmp.eq.s32.totalorder %s30, 0
      %p233 = por %p231, %p232
      %s234 = ssub.s32 %s31, %s43
      %s235 = ssub.s32 %s32, %s39
      %s236 = sor.u32 %s234, %s235
      %p237 = scmp.eq.s32.totalorder %s236, 0
      %s239 = sadd.s32 %s238, 1
      %s240 = scalar_select %p237, %s238, %s239
      %p243 = pneg %p237
      %p244 = scmp.eq.s32.totalorder %s24, 1
      %p245 = por %p243, %p244
      %p246 = scmp.ne.s32.totalorder %s238, %s241
      %p247 = scmp.eq.s32.totalorder %s24, 0
      %p248 = por %p246, %p247
      %p249 = scmp.ne.s32.totalorder %s238, %s241
      %p250 = scmp.eq.s32.totalorder %s29, 1
      %p251 = por %p249, %p250
      %p252 = scmp.ne.s32.totalorder %s241, %s242
      %p253 = scmp.eq.s32.totalorder %s29, 0
      %p254 = por %p252, %p253
      %p255 = scmp.ne.s32.totalorder %s241, %s242
      %p256 = scmp.eq.s32.totalorder %s30, 1
      %p257 = por %p255, %p256
      %p259 = scmp.ne.s32.totalorder %s242, %s258
      %p260 = scmp.eq.s32.totalorder %s30, 0
      %p261 = por %p259, %p260
      %s262 = ssub.s32 %s31, %s43
      %s263 = ssub.s32 %s32, %s39
      %s264 = sor.u32 %s262, %s263
      %p265 = scmp.eq.s32.totalorder %s264, 0
      %s267 = sadd.s32 %s266, 1
      %s268 = scalar_select %p265, %s266, %s267
      %p271 = pneg %p265
      %p272 = scmp.eq.s32.totalorder %s24, 1
      %p273 = por %p271, %p272
      %p274 = scmp.ne.s32.totalorder %s266, %s269
      %p275 = scmp.eq.s32.totalorder %s24, 0
      %p276 = por %p274, %p275
      %p277 = scmp.ne.s32.totalorder %s266, %s269
      %p278 = scmp.eq.s32.totalorder %s29, 1
      %p279 = por %p277, %p278
      %p280 = scmp.ne.s32.totalorder %s269, %s270
      %p281 = scmp.eq.s32.totalorder %s29, 0
      %p282 = por %p280, %p281
      %p283 = scmp.ne.s32.totalorder %s269, %s270
      %p284 = scmp.eq.s32.totalorder %s30, 1
      %p285 = por %p283, %p284
      %p287 = scmp.ne.s32.totalorder %s270, %s286
      %p288 = scmp.eq.s32.totalorder %s30, 0
      %p289 = por %p287, %p288
      %s290 = ssub.s32 %s31, %s43
      %s291 = ssub.s32 %s32, %s39
      %s292 = sor.u32 %s290, %s291
      %p293 = scmp.eq.s32.totalorder %s292, 0
      %s295 = sadd.s32 %s294, 1
      %s296 = scalar_select %p293, %s294, %s295
      %p299 = pneg %p293
      %p300 = scmp.eq.s32.totalorder %s24, 1
      %p301 = por %p299, %p300
      %p302 = scmp.ne.s32.totalorder %s294, %s297
      %p303 = scmp.eq.s32.totalorder %s24, 0
      %p304 = por %p302, %p303
      %p305 = scmp.ne.s32.totalorder %s294, %s297
      %p306 = scmp.eq.s32.totalorder %s29, 1
      %p307 = por %p305, %p306
      %p308 = scmp.ne.s32.totalorder %s297, %s298
      %p309 = scmp.eq.s32.totalorder %s29, 0
      %p310 = por %p308, %p309
      %p311 = scmp.ne.s32.totalorder %s297, %s298
      %p312 = scmp.eq.s32.totalorder %s30, 1
      %p313 = por %p311, %p312
      %p315 = scmp.ne.s32.totalorder %s298, %s314
      %p316 = scmp.eq.s32.totalorder %s30, 0
      %p317 = por %p315, %p316
      %p318 = scmp.le.s32.totalorder 1, %s24
      %p319 = scmp.lt.s32.totalorder %s24, 3
      %p320 = pnand %p318, %p319
      %p321 = pneg %p320
      // Predicated region
      $region9: #{tpu_custom_call.1} parent=5 // pred_check
        _
      $region10: #{tpu_custom_call.1} parent=5 // pred_check_branch
        %323 = sbr.rel (%p320) target = $region12
      $region11: #{tpu_custom_call.1} parent=5 // pred_region
        %s324 = ssub.s32 %s24, 1
        // Predicated region
        $region13: #{tpu_custom_call.1} parent=11 // pred_check
          %p325 = pneg %p85
        $region14: #{tpu_custom_call.1} parent=11 // pred_check_branch
          %327 = sbr.rel (%p325) target = $region16
        $region15: #{tpu_custom_call.1} parent=11 // pred_region
          _
        $region16: #{tpu_custom_call.1} parent=11 // pred_fallthru
          _
        // Predicated region
        $region17: #{tpu_custom_call.1} parent=11 // pred_check
          %p328 = pneg %p106
        $region18: #{tpu_custom_call.1} parent=11 // pred_check_branch
          %330 = sbr.rel (%p328) target = $region20
        $region19: #{tpu_custom_call.1} parent=11 // pred_region
          _
        $region20: #{tpu_custom_call.1} parent=11 // pred_fallthru
          _
        // Predicated region
        $region21: #{tpu_custom_call.1} parent=11 // pred_check
          %p331 = pneg %p127
        $region22: #{tpu_custom_call.1} parent=11 // pred_check_branch
          %333 = sbr.rel (%p331) target = $region24
        $region23: #{tpu_custom_call.1} parent=11 // pred_region
          %335 = vsyncadd [#allocation3], 0
          %s336 = sshll.u32 %s3, 4
          %s337 = int_to_ptr.hbm [resolvable:$true] %s336
          %s338 = sshll.u32 [#allocation2], 4
          %s339 = int_to_ptr.vmem [resolvable:$true] %s338
          %344 = dma.hbm_to_vmem [thread:$0]  %s337, 3072, %s339, [#allocation3], 192, 192, 12
        $region24: #{tpu_custom_call.1} parent=11 // pred_fallthru
          _
        // Predicated region
        $region25: #{tpu_custom_call.1} parent=11 // pred_check
          %p345 = pneg %p148
        $region26: #{tpu_custom_call.1} parent=11 // pred_check_branch
          %347 = sbr.rel (%p345) target = $region28
        $region27: #{tpu_custom_call.1} parent=11 // pred_region
          _
        $region28: #{tpu_custom_call.1} parent=11 // pred_fallthru
          _
        // Predicated region
        $region29: #{tpu_custom_call.1} parent=11 // pred_check
          %p348 = pneg %p174
        $region30: #{tpu_custom_call.1} parent=11 // pred_check_branch
          %350 = sbr.rel (%p348) target = $region32
        $region31: #{tpu_custom_call.1} parent=11 // pred_region
          %s351 = smul.u32 4, %s34
          %p352 = scmp.lt.s32.totalorder %s351, 3
          %s353 = scalar_select %p352, %s351, 3
          %s354 = smul.addr %s353, 8
          %s355 = scalar_lea.vmem %s5, %s354
          %s356 = smul.u32 4, %s34
        $region32: #{tpu_custom_call.1} parent=11 // pred_fallthru
          _
        // Predicated region
        $region33: #{tpu_custom_call.1} parent=11 // pred_check
          %p357 = pneg %p200
        $region34: #{tpu_custom_call.1} parent=11 // pred_check_branch
          %359 = sbr.rel (%p357) target = $region36
        $region35: #{tpu_custom_call.1} parent=11 // pred_region
          %s360 = smul.u32 4, %s34
          %p361 = scmp.lt.s32.totalorder %s360, 3
          %s362 = scalar_select %p361, %s360, 3
          %s363 = smul.addr %s362, 8
          %s364 = scalar_lea.vmem %s6, %s363
          %s365 = smul.u32 4, %s34
        $region36: #{tpu_custom_call.1} parent=11 // pred_fallthru
          _
        // Predicated region
        $region37: #{tpu_custom_call.1} parent=11 // pred_check
          %p366 = pneg %p226
        $region38: #{tpu_custom_call.1} parent=11 // pred_check_branch
          %368 = sbr.rel (%p366) target = $region40
        $region39: #{tpu_custom_call.1} parent=11 // pred_region
          %s369 = smul.u32 4, %s34
          %p370 = scmp.lt.s32.totalorder %s369, 3
          %s371 = scalar_select %p370, %s369, 3
          %s372 = smul.addr %s371, 8
          %s373 = scalar_lea.vmem %s7, %s372
          %s374 = smul.u32 4, %s34
        $region40: #{tpu_custom_call.1} parent=11 // pred_fallthru
          _
      $region12: #{tpu_custom_call.1} parent=5 // pred_fallthru
        _
      %p375 = scmp.lt.s32.totalorder %s24, 2
      // Predicated region
      $region41: #{tpu_custom_call.1} parent=5 // pred_check
        %p376 = pneg %p375
      $region42: #{tpu_custom_call.1} parent=5 // pred_check_branch
        %378 = sbr.rel (%p376) target = $region44
      $region43: #{tpu_custom_call.1} parent=5 // pred_region
        // Predicated region
        $region45: #{tpu_custom_call.1} parent=43 // pred_check
          %p379 = pneg %p58
        $region46: #{tpu_custom_call.1} parent=43 // pred_check_branch
          %381 = sbr.rel (%p379) target = $region48
        $region47: #{tpu_custom_call.1} parent=43 // pred_region
          %s382 = smul.u32 4, %s32
          %p383 = scmp.lt.s32.totalorder %s31, 1
          %s384 = scalar_select %p383, %s31, 1
          %p385 = scmp.lt.s32.totalorder %s382, 3
          %s386 = scalar_select %p385, %s382, 3
          %s387 = smul.addr %s384, 4
          %s388 = sadd.s32 %s386, %s387
          %s389 = smul.addr %s388, 8
          %s390 = scalar_lea.vmem %s0, %s389
          %s391 = smul.u32 4, %s32
        $region48: #{tpu_custom_call.1} parent=43 // pred_fallthru
          _
      $region44: #{tpu_custom_call.1} parent=5 // pred_fallthru
        _
      %p392 = scmp.le.s32.totalorder 1, %s24
      %p393 = scmp.lt.s32.totalorder %s24, 3
      %p394 = pnand %p392, %p393
      %p395 = pneg %p394
      // Predicated region
      $region49: #{tpu_custom_call.1} parent=5 // pred_check
        _
      $region50: #{tpu_custom_call.1} parent=5 // pred_check_branch
        %397 = sbr.rel (%p394) target = $region52
      $region51: #{tpu_custom_call.1} parent=5 // pred_region
        %s398 = ssub.s32 %s24, 1
        // Predicated region
        $region53: #{tpu_custom_call.1} parent=51 // pred_check
          %p399 = pneg %p127
        $region54: #{tpu_custom_call.1} parent=51 // pred_check_branch
          %401 = sbr.rel (%p399) target = $region56
        $region55: #{tpu_custom_call.1} parent=51 // pred_region
          %403 = dma.done [#allocation3], 3072
        $region56: #{tpu_custom_call.1} parent=51 // pred_fallthru
          _
        %s404 = smul.u32 4, %s34
        %p405 = scmp.lt.s32.totalorder %s33, 1
        %s406 = scalar_select %p405, %s33, 1
        %p407 = scmp.lt.s32.totalorder %s404, 3
        %s408 = scalar_select %p407, %s404, 3
        %s409 = smul.addr %s406, 4
        %s410 = sadd.s32 %s408, %s409
        %s411 = smul.addr %s410, 8
        %s412 = scalar_lea.vmem %s0, %s411
        %p413 = pneg %p64
        %p414 = pneg %p61
        %p415 = pneg %p85
        %p416 = pneg %p82
        %p417 = pneg %p106
        %p418 = pneg %p103
        %p419 = pneg %p127
        %p420 = pneg %p124
        %p421 = pneg %p148
        %p422 = pneg %p145
        %s423 = smul.u32 4, %s34
        %p424 = scmp.lt.s32.totalorder %s423, 3
        %s425 = scalar_select %p424, %s423, 3
        %s426 = smul.addr %s425, 8
        %s427 = scalar_lea.vmem %s5, %s426
        %p428 = pneg %p174
        %p429 = pneg %p171
        %s430 = smul.u32 4, %s34
        %p431 = scmp.lt.s32.totalorder %s430, 3
        %s432 = scalar_select %p431, %s430, 3
        %s433 = smul.addr %s432, 8
        %s434 = scalar_lea.vmem %s6, %s433
        %p435 = pneg %p200
        %p436 = pneg %p197
        %s437 = smul.u32 4, %s34
        %p438 = scmp.lt.s32.totalorder %s437, 3
        %s439 = scalar_select %p438, %s437, 3
        %s440 = smul.addr %s439, 8
        %s441 = scalar_lea.vmem %s7, %s440
        %p442 = pneg %p226
        %p443 = pneg %p223
        %p444 = pneg %p254
        %p445 = pneg %p251
        %s446 = sand.u32 %s241, 1
        %s447 = scalar_lea.sflag [#allocation4], %s446
        %s448 = sand.u32 %s241, 1
        %s449 = smul.addr %s448, 16
        %s450 = scalar_lea.vmem [#allocation5], %s449
        %p451 = pneg %p282
        %p452 = pneg %p279
        %s453 = sand.u32 %s29, 1
        %s454 = scalar_lea.sflag [#allocation7], %s453
        %s455 = sand.u32 %s269, 1
        %s456 = smul.addr %s455, 16
        %s457 = scalar_lea.vmem [#allocation6], %s456
        %p458 = pneg %p310
        %p459 = pneg %p307
        %s460 = sand.u32 %s29, 1
        %s461 = scalar_lea.sflag [#allocation7], %s460
        %s462 = sand.u32 %s297, 1
        %s463 = smul.addr %s462, 16
        %s464 = scalar_lea.vmem [#allocation8], %s463
        %s465 = smul.u32 4, %s34
        %p466 = scmp.lt.s32.totalorder %s33, 1
        %s467 = scalar_select %p466, %s33, 1
        %p468 = scmp.lt.s32.totalorder %s465, 3
        %s469 = scalar_select %p468, %s465, 3
        %s470 = smul.addr %s467, 4
        %s471 = sadd.s32 %s469, %s470
        %s472 = smul.addr %s471, 8
        %s473 = scalar_lea.vmem %s0, %s472
        %s474 = smul.u32 4, %s34
        %s475 = smul.u32 4, %s34
        %p476 = scmp.lt.s32.totalorder %s475, 3
        %s477 = scalar_select %p476, %s475, 3
        %s478 = smul.addr %s477, 8
        %s479 = scalar_lea.vmem %s5, %s478
        %s480 = smul.u32 4, %s34
        %s481 = smul.u32 4, %s34
        %p482 = scmp.lt.s32.totalorder %s481, 3
        %s483 = scalar_select %p482, %s481, 3
        %s484 = smul.addr %s483, 8
        %s485 = scalar_lea.vmem %s6, %s484
        %s486 = smul.u32 4, %s34
        %s487 = smul.u32 4, %s34
        %p488 = scmp.lt.s32.totalorder %s487, 3
        %s489 = scalar_select %p488, %s487, 3
        %s490 = smul.addr %s489, 8
        %s491 = scalar_lea.vmem %s7, %s490
        %s492 = smul.u32 4, %s34
        %s493 = smul.u32 4, %s34
        %s494 = smul.u32 4, %s34
        %s495 = smul.u32 4, %s34
        %v496 = vld [vmem:[%s473] sm:$0xff]
        %v497 = vld [vmem:[%s473 + $0x8] sm:$0xff]
        %v498 = vld [vmem:[%s473 + $0x10] sm:$0xff]
        %v499 = vld [vmem:[%s473 + $0x18] sm:$0xff]
        %v500 = vld [vmem:[%s1] sm:$0x1]
        %v501 = vld [vmem:[%s2] sm:$0x1]
        %502 = vadd.xlane.f32.xlu0 %v496
        %v503 = vpop.xlane.xlu0 %502
        %504 = vadd.xlane.f32.xlu0 %v497
        %v505 = vpop.xlane.xlu0 %504
        %506 = vadd.xlane.f32.xlu0 %v498
        %v507 = vpop.xlane.xlu0 %506
        %508 = vadd.xlane.f32.xlu0 %v499
        %v509 = vpop.xlane.xlu0 %508
        %v510 = vrcp.pop 128.0
        %v511 = vmul.f32 128.0, %v510
        %v512 = vsub.f32 1.0, %v511
        %v513 = vmul.f32 %v510, %v512
        %v514 = vadd.f32 %v510, %v513
        %vm515 = vweird.f32 %v510
        %v516 = vsel %vm515, %v510, %v514
        %v517 = vmul.f32 %v503, %v516
        %v518 = vmul.f32 %v505, %v516
        %v519 = vmul.f32 %v507, %v516
        %v520 = vmul.f32 %v509, %v516
        %v521 = vsub.f32 %v496, %v517
        %v522 = vsub.f32 %v497, %v518
        %v523 = vsub.f32 %v498, %v519
        %v524 = vsub.f32 %v499, %v520
        %v525 = vmul.f32 %v521, %v521
        %v526 = vmul.f32 %v522, %v522
        %v527 = vmul.f32 %v523, %v523
        %v528 = vmul.f32 %v524, %v524
        %529 = vadd.xlane.f32.xlu0 %v525
        %v530 = vpop.xlane.xlu0 %529
        %531 = vadd.xlane.f32.xlu0 %v526
        %v532 = vpop.xlane.xlu0 %531
        %533 = vadd.xlane.f32.xlu0 %v527
        %v534 = vpop.xlane.xlu0 %533
        %535 = vadd.xlane.f32.xlu0 %v528
        %v536 = vpop.xlane.xlu0 %535
        %v537 = vmul.f32 %v530, %v516
        %v538 = vmul.f32 %v532, %v516
        %v539 = vmul.f32 %v534, %v516
        %v540 = vmul.f32 %v536, %v516
        %v541 = vadd.f32 %v537, 1e-05
        %v542 = vadd.f32 %v538, 1e-05
        %v543 = vadd.f32 %v539, 1e-05
        %v544 = vadd.f32 %v540, 1e-05
        %v545 = vrsqrt.pop %v541
        %v546 = vmul.f32 %v545, %v541
        %v547 = vmul.f32 %v546, %v545
        %v548 = vmul.f32 0.5, %v547
        %v549 = vsub.f32 1.5, %v548
        %v550 = vmul.f32 %v545, %v549
        %vm551 = vweird.f32 %v541
        %vm552 = vweird.f32 %v545
        %vm553 = vmor %vm551, %vm552
        %v554 = vsel %vm553, %v545, %v550
        %v555 = vrsqrt.pop %v542
        %v556 = vmul.f32 %v555, %v542
        %v557 = vmul.f32 %v556, %v555
        %v558 = vmul.f32 0.5, %v557
        %v559 = vsub.f32 1.5, %v558
        %v560 = vmul.f32 %v555, %v559
        %vm561 = vweird.f32 %v542
        %vm562 = vweird.f32 %v555
        %vm563 = vmor %vm561, %vm562
        %v564 = vsel %vm563, %v555, %v560
        %v565 = vrsqrt.pop %v543
        %v566 = vmul.f32 %v565, %v543
        %v567 = vmul.f32 %v566, %v565
        %v568 = vmul.f32 0.5, %v567
        %v569 = vsub.f32 1.5, %v568
        %v570 = vmul.f32 %v565, %v569
        %vm571 = vweird.f32 %v543
        %vm572 = vweird.f32 %v565
        %vm573 = vmor %vm571, %vm572
        %v574 = vsel %vm573, %v565, %v570
        %v575 = vrsqrt.pop %v544
        %v576 = vmul.f32 %v575, %v544
        %v577 = vmul.f32 %v576, %v575
        %v578 = vmul.f32 0.5, %v577
        %v579 = vsub.f32 1.5, %v578
        %v580 = vmul.f32 %v575, %v579
        %vm581 = vweird.f32 %v544
        %vm582 = vweird.f32 %v575
        %vm583 = vmor %vm581, %vm582
        %v584 = vsel %vm583, %v575, %v580
        %v585 = vmul.f32 %v521, %v554
        %v586 = vmul.f32 %v522, %v564
        %v587 = vmul.f32 %v523, %v574
        %v588 = vmul.f32 %v524, %v584
        %v590 = vperm.slane %v500, 0
        %v592 = vmul.f32 %v585, %v590
        %v593 = vmul.f32 %v586, %v590
        %v594 = vmul.f32 %v587, %v590
        %v595 = vmul.f32 %v588, %v590
        %v597 = vperm.slane %v501, 0
        %v599 = vadd.f32 %v592, %v597
        %v600 = vadd.f32 %v593, %v597
        %v601 = vadd.f32 %v594, %v597
        %v602 = vadd.f32 %v595, %v597
        %v603 = vpack.c.bf16 %v600, %v599
        %v604 = vpack.c.bf16 %v602, %v601
        %v605 = vld [vmem:[#allocation2] sm:$0xff]
        %v606 = vld [vmem:[#allocation2 + $0x8] sm:$0xf]
        %v607 = vld [vmem:[#allocation2 + $0xc] sm:$0xff]
        %v608 = vld [vmem:[#allocation2 + $0x14] sm:$0xf]
        %v609 = vld [vmem:[#allocation2 + $0x18] sm:$0xff]
        %v610 = vld [vmem:[#allocation2 + $0x20] sm:$0xf]
        %v611 = vld [vmem:[#allocation2 + $0x24] sm:$0xff]
        %v612 = vld [vmem:[#allocation2 + $0x2c] sm:$0xf]
        %v613 = vld [vmem:[#allocation2 + $0x30] sm:$0xff]
        %v614 = vld [vmem:[#allocation2 + $0x38] sm:$0xf]
        %v615 = vld [vmem:[#allocation2 + $0x3c] sm:$0xff]
        %v616 = vld [vmem:[#allocation2 + $0x44] sm:$0xf]
        %v617 = vld [vmem:[#allocation2 + $0x48] sm:$0xff]
        %v618 = vld [vmem:[#allocation2 + $0x50] sm:$0xf]
        %v619 = vld [vmem:[#allocation2 + $0x54] sm:$0xff]
        %v620 = vld [vmem:[#allocation2 + $0x5c] sm:$0xf]
        %v621 = vld [vmem:[#allocation2 + $0x60] sm:$0xff]
        %v622 = vld [vmem:[#allocation2 + $0x68] sm:$0xf]
        %v623 = vld [vmem:[#allocation2 + $0x6c] sm:$0xff]
        %v624 = vld [vmem:[#allocation2 + $0x74] sm:$0xf]
        %v625 = vld [vmem:[#allocation2 + $0x78] sm:$0xff]
        %v626 = vld [vmem:[#allocation2 + $0x80] sm:$0xf]
        %v627 = vld [vmem:[#allocation2 + $0x84] sm:$0xff]
        %v628 = vld [vmem:[#allocation2 + $0x8c] sm:$0xf]
        %v629 = vld [vmem:[#allocation2 + $0x90] sm:$0xff]
        %v630 = vld [vmem:[#allocation2 + $0x98] sm:$0xf]
        %v631 = vld [vmem:[#allocation2 + $0x9c] sm:$0xff]
        %v632 = vld [vmem:[#allocation2 + $0xa4] sm:$0xf]
        %v633 = vld [vmem:[#allocation2 + $0xa8] sm:$0xff]
        %v634 = vld [vmem:[#allocation2 + $0xb0] sm:$0xf]
        %v635 = vld [vmem:[#allocation2 + $0xb4] sm:$0xff]
        %v636 = vld [vmem:[#allocation2 + $0xbc] sm:$0xf]
        %v637 = vld [vmem:[%s4] sm:$0x7]
        %v639 = vperm.slane %v637, 0
        %v640 = vperm.slane %v637, 1
        %v641 = vperm.slane %v637, 2
        %v677 = vunpack.c.l.b16 %v605
        %v678 = vunpack.c.h.b16 %v605
        %v679 = vunpack.c.l.b16 %v606
        %v680 = vunpack.c.l.b16 %v607
        %v681 = vunpack.c.h.b16 %v607
        %v682 = vunpack.c.l.b16 %v608
        %v683 = vunpack.c.l.b16 %v609
        %v684 = vunpack.c.h.b16 %v609
        %v685 = vunpack.c.l.b16 %v610
        %v686 = vunpack.c.l.b16 %v611
        %v687 = vunpack.c.h.b16 %v611
        %v688 = vunpack.c.l.b16 %v612
        %v689 = vunpack.c.l.b16 %v613
        %v690 = vunpack.c.h.b16 %v613
        %v691 = vunpack.c.l.b16 %v614
        %v692 = vunpack.c.l.b16 %v615
        %v693 = vunpack.c.h.b16 %v615
        %v694 = vunpack.c.l.b16 %v616
        %v695 = vunpack.c.l.b16 %v617
        %v696 = vunpack.c.h.b16 %v617
        %v697 = vunpack.c.l.b16 %v618
        %v698 = vunpack.c.l.b16 %v619
        %v699 = vunpack.c.h.b16 %v619
        %v700 = vunpack.c.l.b16 %v620
        %v701 = vunpack.c.l.b16 %v621
        %v702 = vunpack.c.h.b16 %v621
        %v703 = vunpack.c.l.b16 %v622
        %v704 = vunpack.c.l.b16 %v623
        %v705 = vunpack.c.h.b16 %v623
        %v706 = vunpack.c.l.b16 %v624
        %v707 = vunpack.c.l.b16 %v625
        %v708 = vunpack.c.h.b16 %v625
        %v709 = vunpack.c.l.b16 %v626
        %v710 = vunpack.c.l.b16 %v627
        %v711 = vunpack.c.h.b16 %v627
        %v712 = vunpack.c.l.b16 %v628
        %v713 = vunpack.c.l.b16 %v629
        %v714 = vunpack.c.h.b16 %v629
        %v715 = vunpack.c.l.b16 %v630
        %v716 = vunpack.c.l.b16 %v631
        %v717 = vunpack.c.h.b16 %v631
        %v718 = vunpack.c.l.b16 %v632
        %v719 = vunpack.c.l.b16 %v633
        %v720 = vunpack.c.h.b16 %v633
        %v721 = vunpack.c.l.b16 %v634
        %v722 = vunpack.c.l.b16 %v635
        %v723 = vunpack.c.h.b16 %v635
        %v724 = vunpack.c.l.b16 %v636
        %v725 = vpack.c.b16 %v680, %v677
        %v726 = vpack.c.b16 %v681, %v678
        %v727 = vpack.c.b16 %v682, %v679
        %v728 = vpack.c.b16 %v686, %v683
        %v729 = vpack.c.b16 %v687, %v684
        %v730 = vpack.c.b16 %v688, %v685
        %v731 = vpack.c.b16 %v692, %v689
        %v732 = vpack.c.b16 %v693, %v690
        %v733 = vpack.c.b16 %v694, %v691
        %v734 = vpack.c.b16 %v698, %v695
        %v735 = vpack.c.b16 %v699, %v696
        %v736 = vpack.c.b16 %v700, %v697
        %v737 = vpack.c.b16 %v704, %v701
        %v738 = vpack.c.b16 %v705, %v702
        %v739 = vpack.c.b16 %v706, %v703
        %v740 = vpack.c.b16 %v710, %v707
        %v741 = vpack.c.b16 %v711, %v708
        %v742 = vpack.c.b16 %v712, %v709
        %v743 = vpack.c.b16 %v716, %v713
        %v744 = vpack.c.b16 %v717, %v714
        %v745 = vpack.c.b16 %v718, %v715
        %v746 = vpack.c.b16 %v722, %v719
        %v747 = vpack.c.b16 %v723, %v720
        %v748 = vpack.c.b16 %v724, %v721
        %773 = vmatpush.bf16.msra.mxu0 %v746
        %774 = vmatpush.bf16.msra.mxu0 %v743
        %775 = vmatpush.bf16.msra.mxu0 %v740
        %776 = vmatpush.bf16.msra.mxu0 %v737
        %777 = vmatpush.bf16.msra.mxu0 %v734
        %778 = vmatpush.bf16.msra.mxu0 %v731
        %779 = vmatpush.bf16.msra.mxu0 %v728
        %780 = vmatpush.bf16.msra.mxu0 %v725
        %781 = vmatmul.bf16.gmra.mxu0 %v603
        %v782 = vpop.f32.mrf.mxu0
        %v783 = vadd.f32 %v639, %v782
        %v784 = vpop.f32.mrf.mxu0
        %v785 = vadd.f32 %v639, %v784
        %786 = vmatmul.bf16.gmra.mxu0 %v604
        %v787 = vpop.f32.mrf.mxu0
        %v788 = vadd.f32 %v639, %v787
        %v789 = vpop.f32.mrf.mxu0
        %v790 = vadd.f32 %v639, %v789
        %791 = vdwg.mxu0
        %792 = vmatpush.bf16.msra.mxu0 %v747
        %793 = vmatpush.bf16.msra.mxu0 %v744
        %794 = vmatpush.bf16.msra.mxu0 %v741
        %795 = vmatpush.bf16.msra.mxu0 %v738
        %796 = vmatpush.bf16.msra.mxu0 %v735
        %797 = vmatpush.bf16.msra.mxu0 %v732
        %798 = vmatpush.bf16.msra.mxu0 %v729
        %799 = vmatpush.bf16.msra.mxu0 %v726
        %800 = vmatmul.bf16.gmra.mxu0 %v603
        %v801 = vpop.f32.mrf.mxu0
        %v802 = vadd.f32 %v640, %v801
        %v803 = vpop.f32.mrf.mxu0
        %v804 = vadd.f32 %v640, %v803
        %805 = vmatmul.bf16.gmra.mxu0 %v604
        %v806 = vpop.f32.mrf.mxu0
        %v807 = vadd.f32 %v640, %v806
        %v808 = vpop.f32.mrf.mxu0
        %v809 = vadd.f32 %v640, %v808
        %810 = vdwg.mxu0
        %811 = vmatpush.bf16.msra.mxu0 %v748
        %812 = vmatpush.bf16.msra.mxu0 %v745
        %813 = vmatpush.bf16.msra.mxu0 %v742
        %814 = vmatpush.bf16.msra.mxu0 %v739
        %815 = vmatpush.bf16.msra.mxu0 %v736
        %816 = vmatpush.bf16.msra.mxu0 %v733
        %817 = vmatpush.bf16.msra.mxu0 %v730
        %818 = vmatpush.bf16.msra.mxu0 %v727
        %819 = vmatmul.bf16.gmra.mxu0 %v603
        %v820 = vpop.f32.mrf.mxu0
        %v821 = vadd.f32 %v641, %v820
        %v822 = vpop.f32.mrf.mxu0
        %v823 = vadd.f32 %v641, %v822
        %824 = vmatmul.bf16.gmra.mxu0 %v604
        %v825 = vpop.f32.mrf.mxu0
        %v826 = vadd.f32 %v641, %v825
        %v827 = vpop.f32.mrf.mxu0
        %v828 = vadd.f32 %v641, %v827
        %829 = vdwg.mxu0
        %v830 = vld [vmem:[%s479] sm:$0xff]
        %v831 = vld [vmem:[%s479 + $0x8] sm:$0xff]
        %v832 = vld [vmem:[%s479 + $0x10] sm:$0xff]
        %v833 = vld [vmem:[%s479 + $0x18] sm:$0xff]
        %838 = vrot.lane.b32.xlu0 %v830, 16
        %v839 = vpop.permute.xlu0 %838
        %840 = vrot.lane.b32.xlu0 %v831, 16
        %v841 = vpop.permute.xlu0 %840
        %842 = vrot.lane.b32.xlu0 %v832, 16
        %v843 = vpop.permute.xlu0 %842
        %844 = vrot.lane.b32.xlu0 %v833, 16
        %v845 = vpop.permute.xlu0 %844
        %850 = vrot.lane.b32.xlu0 %v830, 32
        %v851 = vpop.permute.xlu0 %850
        %852 = vrot.lane.b32.xlu0 %v831, 32
        %v853 = vpop.permute.xlu0 %852
        %854 = vrot.lane.b32.xlu0 %v832, 32
        %v855 = vpop.permute.xlu0 %854
        %856 = vrot.lane.b32.xlu0 %v833, 32
        %v857 = vpop.permute.xlu0 %856
        %862 = vrot.lane.b32.xlu0 %v830, 48
        %v863 = vpop.permute.xlu0 %862
        %864 = vrot.lane.b32.xlu0 %v831, 48
        %v865 = vpop.permute.xlu0 %864
        %866 = vrot.lane.b32.xlu0 %v832, 48
        %v867 = vpop.permute.xlu0 %866
        %868 = vrot.lane.b32.xlu0 %v833, 48
        %v869 = vpop.permute.xlu0 %868
        %874 = vrot.lane.b32.xlu0 %v830, 64
        %v875 = vpop.permute.xlu0 %874
        %876 = vrot.lane.b32.xlu0 %v831, 64
        %v877 = vpop.permute.xlu0 %876
        %878 = vrot.lane.b32.xlu0 %v832, 64
        %v879 = vpop.permute.xlu0 %878
        %880 = vrot.lane.b32.xlu0 %v833, 64
        %v881 = vpop.permute.xlu0 %880
        %886 = vrot.lane.b32.xlu0 %v830, 80
        %v887 = vpop.permute.xlu0 %886
        %888 = vrot.lane.b32.xlu0 %v831, 80
        %v889 = vpop.permute.xlu0 %888
        %890 = vrot.lane.b32.xlu0 %v832, 80
        %v891 = vpop.permute.xlu0 %890
        %892 = vrot.lane.b32.xlu0 %v833, 80
        %v893 = vpop.permute.xlu0 %892
        %898 = vrot.lane.b32.xlu0 %v830, 96
        %v899 = vpop.permute.xlu0 %898
        %900 = vrot.lane.b32.xlu0 %v831, 96
        %v901 = vpop.permute.xlu0 %900
        %902 = vrot.lane.b32.xlu0 %v832, 96
        %v903 = vpop.permute.xlu0 %902
        %904 = vrot.lane.b32.xlu0 %v833, 96
        %v905 = vpop.permute.xlu0 %904
        %910 = vrot.lane.b32.xlu0 %v830, 112
        %v911 = vpop.permute.xlu0 %910
        %912 = vrot.lane.b32.xlu0 %v831, 112
        %v913 = vpop.permute.xlu0 %912
        %914 = vrot.lane.b32.xlu0 %v832, 112
        %v915 = vpop.permute.xlu0 %914
        %916 = vrot.lane.b32.xlu0 %v833, 112
        %v917 = vpop.permute.xlu0 %916
        %vm922 = vcmask 130048
        %v923 = vsel %vm922, %v830, %v839
        %v924 = vsel %vm922, %v831, %v841
        %v925 = vsel %vm922, %v832, %v843
        %v926 = vsel %vm922, %v833, %v845
        %vm927 = vcmask 261120
        %v928 = vsel %vm927, %v923, %v851
        %v929 = vsel %vm927, %v924, %v853
        %v930 = vsel %vm927, %v925, %v855
        %v931 = vsel %vm927, %v926, %v857
        %vm932 = vcmask 392192
        %v933 = vsel %vm932, %v928, %v863
        %v934 = vsel %vm932, %v929, %v865
        %v935 = vsel %vm932, %v930, %v867
        %v936 = vsel %vm932, %v931, %v869
        %vm937 = vcmask 523264
        %v938 = vsel %vm937, %v933, %v875
        %v939 = vsel %vm937, %v934, %v877
        %v940 = vsel %vm937, %v935, %v879
        %v941 = vsel %vm937, %v936, %v881
        %vm942 = vcmask 654336
        %v943 = vsel %vm942, %v938, %v887
        %v944 = vsel %vm942, %v939, %v889
        %v945 = vsel %vm942, %v940, %v891
        %v946 = vsel %vm942, %v941, %v893
        %vm947 = vcmask 785408
        %v948 = vsel %vm947, %v943, %v899
        %v949 = vsel %vm947, %v944, %v901
        %v950 = vsel %vm947, %v945, %v903
        %v951 = vsel %vm947, %v946, %v905
        %vm952 = vcmask 916480
        %v953 = vsel %vm952, %v948, %v911
        %v954 = vsel %vm952, %v949, %v913
        %v955 = vsel %vm952, %v950, %v915
        %v956 = vsel %vm952, %v951, %v917
        %v957 = vld [vmem:[%s485] sm:$0xff]
        %v958 = vld [vmem:[%s485 + $0x8] sm:$0xff]
        %v959 = vld [vmem:[%s485 + $0x10] sm:$0xff]
        %v960 = vld [vmem:[%s485 + $0x18] sm:$0xff]
        %965 = vrot.lane.b32.xlu0 %v957, 16
        %v966 = vpop.permute.xlu0 %965
        %967 = vrot.lane.b32.xlu0 %v958, 16
        %v968 = vpop.permute.xlu0 %967
        %969 = vrot.lane.b32.xlu0 %v959, 16
        %v970 = vpop.permute.xlu0 %969
        %971 = vrot.lane.b32.xlu0 %v960, 16
        %v972 = vpop.permute.xlu0 %971
        %977 = vrot.lane.b32.xlu0 %v957, 32
        %v978 = vpop.permute.xlu0 %977
        %979 = vrot.lane.b32.xlu0 %v958, 32
        %v980 = vpop.permute.xlu0 %979
        %981 = vrot.lane.b32.xlu0 %v959, 32
        %v982 = vpop.permute.xlu0 %981
        %983 = vrot.lane.b32.xlu0 %v960, 32
        %v984 = vpop.permute.xlu0 %983
        %989 = vrot.lane.b32.xlu0 %v957, 48
        %v990 = vpop.permute.xlu0 %989
        %991 = vrot.lane.b32.xlu0 %v958, 48
        %v992 = vpop.permute.xlu0 %991
        %993 = vrot.lane.b32.xlu0 %v959, 48
        %v994 = vpop.permute.xlu0 %993
        %995 = vrot.lane.b32.xlu0 %v960, 48
        %v996 = vpop.permute.xlu0 %995
        %1001 = vrot.lane.b32.xlu0 %v957, 64
        %v1002 = vpop.permute.xlu0 %1001
        %1003 = vrot.lane.b32.xlu0 %v958, 64
        %v1004 = vpop.permute.xlu0 %1003
        %1005 = vrot.lane.b32.xlu0 %v959, 64
        %v1006 = vpop.permute.xlu0 %1005
        %1007 = vrot.lane.b32.xlu0 %v960, 64
        %v1008 = vpop.permute.xlu0 %1007
        %1013 = vrot.lane.b32.xlu0 %v957, 80
        %v1014 = vpop.permute.xlu0 %1013
        %1015 = vrot.lane.b32.xlu0 %v958, 80
        %v1016 = vpop.permute.xlu0 %1015
        %1017 = vrot.lane.b32.xlu0 %v959, 80
        %v1018 = vpop.permute.xlu0 %1017
        %1019 = vrot.lane.b32.xlu0 %v960, 80
        %v1020 = vpop.permute.xlu0 %1019
        %1025 = vrot.lane.b32.xlu0 %v957, 96
        %v1026 = vpop.permute.xlu0 %1025
        %1027 = vrot.lane.b32.xlu0 %v958, 96
        %v1028 = vpop.permute.xlu0 %1027
        %1029 = vrot.lane.b32.xlu0 %v959, 96
        %v1030 = vpop.permute.xlu0 %1029
        %1031 = vrot.lane.b32.xlu0 %v960, 96
        %v1032 = vpop.permute.xlu0 %1031
        %1037 = vrot.lane.b32.xlu0 %v957, 112
        %v1038 = vpop.permute.xlu0 %1037
        %1039 = vrot.lane.b32.xlu0 %v958, 112
        %v1040 = vpop.permute.xlu0 %1039
        %1041 = vrot.lane.b32.xlu0 %v959, 112
        %v1042 = vpop.permute.xlu0 %1041
        %1043 = vrot.lane.b32.xlu0 %v960, 112
        %v1044 = vpop.permute.xlu0 %1043
        %v1049 = vsel %vm922, %v957, %v966
        %v1050 = vsel %vm922, %v958, %v968
        %v1051 = vsel %vm922, %v959, %v970
        %v1052 = vsel %vm922, %v960, %v972
        %v1053 = vsel %vm927, %v1049, %v978
        %v1054 = vsel %vm927, %v1050, %v980
        %v1055 = vsel %vm927, %v1051, %v982
        %v1056 = vsel %vm927, %v1052, %v984
        %v1057 = vsel %vm932, %v1053, %v990
        %v1058 = vsel %vm932, %v1054, %v992
        %v1059 = vsel %vm932, %v1055, %v994
        %v1060 = vsel %vm932, %v1056, %v996
        %v1061 = vsel %vm937, %v1057, %v1002
        %v1062 = vsel %vm937, %v1058, %v1004
        %v1063 = vsel %vm937, %v1059, %v1006
        %v1064 = vsel %vm937, %v1060, %v1008
        %v1065 = vsel %vm942, %v1061, %v1014
        %v1066 = vsel %vm942, %v1062, %v1016
        %v1067 = vsel %vm942, %v1063, %v1018
        %v1068 = vsel %vm942, %v1064, %v1020
        %v1069 = vsel %vm947, %v1065, %v1026
        %v1070 = vsel %vm947, %v1066, %v1028
        %v1071 = vsel %vm947, %v1067, %v1030
        %v1072 = vsel %vm947, %v1068, %v1032
        %v1073 = vsel %vm952, %v1069, %v1038
        %v1074 = vsel %vm952, %v1070, %v1040
        %v1075 = vsel %vm952, %v1071, %v1042
        %v1076 = vsel %vm952, %v1072, %v1044
        %v1077 = vld [vmem:[%s491] sm:$0xff]
        %v1078 = vld [vmem:[%s491 + $0x8] sm:$0xff]
        %v1079 = vld [vmem:[%s491 + $0x10] sm:$0xff]
        %v1080 = vld [vmem:[%s491 + $0x18] sm:$0xff]
        %1085 = vrot.lane.b32.xlu0 %v1077, 16
        %v1086 = vpop.permute.xlu0 %1085
        %1087 = vrot.lane.b32.xlu0 %v1078, 16
        %v1088 = vpop.permute.xlu0 %1087
        %1089 = vrot.lane.b32.xlu0 %v1079, 16
        %v1090 = vpop.permute.xlu0 %1089
        %1091 = vrot.lane.b32.xlu0 %v1080, 16
        %v1092 = vpop.permute.xlu0 %1091
        %1097 = vrot.lane.b32.xlu0 %v1077, 32
        %v1098 = vpop.permute.xlu0 %1097
        %1099 = vrot.lane.b32.xlu0 %v1078, 32
        %v1100 = vpop.permute.xlu0 %1099
        %1101 = vrot.lane.b32.xlu0 %v1079, 32
        %v1102 = vpop.permute.xlu0 %1101
        %1103 = vrot.lane.b32.xlu0 %v1080, 32
        %v1104 = vpop.permute.xlu0 %1103
        %1109 = vrot.lane.b32.xlu0 %v1077, 48
        %v1110 = vpop.permute.xlu0 %1109
        %1111 = vrot.lane.b32.xlu0 %v1078, 48
        %v1112 = vpop.permute.xlu0 %1111
        %1113 = vrot.lane.b32.xlu0 %v1079, 48
        %v1114 = vpop.permute.xlu0 %1113
        %1115 = vrot.lane.b32.xlu0 %v1080, 48
        %v1116 = vpop.permute.xlu0 %1115
        %1121 = vrot.lane.b32.xlu0 %v1077, 64
        %v1122 = vpop.permute.xlu0 %1121
        %1123 = vrot.lane.b32.xlu0 %v1078, 64
        %v1124 = vpop.permute.xlu0 %1123
        %1125 = vrot.lane.b32.xlu0 %v1079, 64
        %v1126 = vpop.permute.xlu0 %1125
        %1127 = vrot.lane.b32.xlu0 %v1080, 64
        %v1128 = vpop.permute.xlu0 %1127
        %1133 = vrot.lane.b32.xlu0 %v1077, 80
        %v1134 = vpop.permute.xlu0 %1133
        %1135 = vrot.lane.b32.xlu0 %v1078, 80
        %v1136 = vpop.permute.xlu0 %1135
        %1137 = vrot.lane.b32.xlu0 %v1079, 80
        %v1138 = vpop.permute.xlu0 %1137
        %1139 = vrot.lane.b32.xlu0 %v1080, 80
        %v1140 = vpop.permute.xlu0 %1139
        %1145 = vrot.lane.b32.xlu0 %v1077, 96
        %v1146 = vpop.permute.xlu0 %1145
        %1147 = vrot.lane.b32.xlu0 %v1078, 96
        %v1148 = vpop.permute.xlu0 %1147
        %1149 = vrot.lane.b32.xlu0 %v1079, 96
        %v1150 = vpop.permute.xlu0 %1149
        %1151 = vrot.lane.b32.xlu0 %v1080, 96
        %v1152 = vpop.permute.xlu0 %1151
        %1157 = vrot.lane.b32.xlu0 %v1077, 112
        %v1158 = vpop.permute.xlu0 %1157
        %1159 = vrot.lane.b32.xlu0 %v1078, 112
        %v1160 = vpop.permute.xlu0 %1159
        %1161 = vrot.lane.b32.xlu0 %v1079, 112
        %v1162 = vpop.permute.xlu0 %1161
        %1163 = vrot.lane.b32.xlu0 %v1080, 112
        %v1164 = vpop.permute.xlu0 %1163
        %v1169 = vsel %vm922, %v1077, %v1086
        %v1170 = vsel %vm922, %v1078, %v1088
        %v1171 = vsel %vm922, %v1079, %v1090
        %v1172 = vsel %vm922, %v1080, %v1092
        %v1173 = vsel %vm927, %v1169, %v1098
        %v1174 = vsel %vm927, %v1170, %v1100
        %v1175 = vsel %vm927, %v1171, %v1102
        %v1176 = vsel %vm927, %v1172, %v1104
        %v1177 = vsel %vm932, %v1173, %v1110
        %v1178 = vsel %vm932, %v1174, %v1112
        %v1179 = vsel %vm932, %v1175, %v1114
        %v1180 = vsel %vm932, %v1176, %v1116
        %v1181 = vsel %vm937, %v1177, %v1122
        %v1182 = vsel %vm937, %v1178, %v1124
        %v1183 = vsel %vm937, %v1179, %v1126
        %v1184 = vsel %vm937, %v1180, %v1128
        %v1185 = vsel %vm942, %v1181, %v1134
        %v1186 = vsel %vm942, %v1182, %v1136
        %v1187 = vsel %vm942, %v1183, %v1138
        %v1188 = vsel %vm942, %v1184, %v1140
        %v1189 = vsel %vm947, %v1185, %v1146
        %v1190 = vsel %vm947, %v1186, %v1148
        %v1191 = vsel %vm947, %v1187, %v1150
        %v1192 = vsel %vm947, %v1188, %v1152
        %v1193 = vsel %vm952, %v1189, %v1158
        %v1194 = vsel %vm952, %v1190, %v1160
        %v1195 = vsel %vm952, %v1191, %v1162
        %v1196 = vsel %vm952, %v1192, %v1164
        %1201 = vrot.lane.b32.xlu0 %v783, 120
        %v1202 = vpop.permute.xlu0 %1201
        %1203 = vrot.lane.b32.xlu0 %v785, 120
        %v1204 = vpop.permute.xlu0 %1203
        %1205 = vrot.lane.b32.xlu0 %v788, 120
        %v1206 = vpop.permute.xlu0 %1205
        %1207 = vrot.lane.b32.xlu0 %v790, 120
        %v1208 = vpop.permute.xlu0 %1207
        %1213 = vrot.lane.b32.xlu0 %v783, 8
        %v1214 = vpop.permute.xlu0 %1213
        %1215 = vrot.lane.b32.xlu0 %v785, 8
        %v1216 = vpop.permute.xlu0 %1215
        %1217 = vrot.lane.b32.xlu0 %v788, 8
        %v1218 = vpop.permute.xlu0 %1217
        %1219 = vrot.lane.b32.xlu0 %v790, 8
        %v1220 = vpop.permute.xlu0 %1219
        %v1225 = vmul.f32 %v783, %v953
        %v1226 = vmul.f32 %v785, %v954
        %v1227 = vmul.f32 %v788, %v955
        %v1228 = vmul.f32 %v790, %v956
        %v1229 = vmul.f32 %v1202, %v1073
        %v1230 = vmul.f32 %v1204, %v1074
        %v1231 = vmul.f32 %v1206, %v1075
        %v1232 = vmul.f32 %v1208, %v1076
        %v1233 = vadd.f32 %v1225, %v1229
        %v1234 = vadd.f32 %v1226, %v1230
        %v1235 = vadd.f32 %v1227, %v1231
        %v1236 = vadd.f32 %v1228, %v1232
        %v1237 = vmul.f32 %v1214, %v1193
        %v1238 = vmul.f32 %v1216, %v1194
        %v1239 = vmul.f32 %v1218, %v1195
        %v1240 = vmul.f32 %v1220, %v1196
        %v1241 = vadd.f32 %v1233, %v1237
        %v1242 = vadd.f32 %v1234, %v1238
        %v1243 = vadd.f32 %v1235, %v1239
        %v1244 = vadd.f32 %v1236, %v1240
        %v1245 = vpack.c.bf16 %v1241, %v1241
        %v1246 = vpack.c.bf16 %v1242, %v1242
        %v1247 = vpack.c.bf16 %v1243, %v1243
        %v1248 = vpack.c.bf16 %v1244, %v1244
        %1249 = vst [vmem:[%s450] sm:$0xf] %v1245
        %1250 = vst [vmem:[%s450 + $0x4] sm:$0xf] %v1246
        %1251 = vst [vmem:[%s450 + $0x8] sm:$0xf] %v1247
        %1252 = vst [vmem:[%s450 + $0xc] sm:$0xf] %v1248
        %1257 = vrot.lane.b32.xlu0 %v802, 120
        %v1258 = vpop.permute.xlu0 %1257
        %1259 = vrot.lane.b32.xlu0 %v804, 120
        %v1260 = vpop.permute.xlu0 %1259
        %1261 = vrot.lane.b32.xlu0 %v807, 120
        %v1262 = vpop.permute.xlu0 %1261
        %1263 = vrot.lane.b32.xlu0 %v809, 120
        %v1264 = vpop.permute.xlu0 %1263
        %1269 = vrot.lane.b32.xlu0 %v802, 8
        %v1270 = vpop.permute.xlu0 %1269
        %1271 = vrot.lane.b32.xlu0 %v804, 8
        %v1272 = vpop.permute.xlu0 %1271
        %1273 = vrot.lane.b32.xlu0 %v807, 8
        %v1274 = vpop.permute.xlu0 %1273
        %1275 = vrot.lane.b32.xlu0 %v809, 8
        %v1276 = vpop.permute.xlu0 %1275
        %v1281 = vmul.f32 %v802, %v953
        %v1282 = vmul.f32 %v804, %v954
        %v1283 = vmul.f32 %v807, %v955
        %v1284 = vmul.f32 %v809, %v956
        %v1285 = vmul.f32 %v1258, %v1073
        %v1286 = vmul.f32 %v1260, %v1074
        %v1287 = vmul.f32 %v1262, %v1075
        %v1288 = vmul.f32 %v1264, %v1076
        %v1289 = vadd.f32 %v1281, %v1285
        %v1290 = vadd.f32 %v1282, %v1286
        %v1291 = vadd.f32 %v1283, %v1287
        %v1292 = vadd.f32 %v1284, %v1288
        %v1293 = vmul.f32 %v1270, %v1193
        %v1294 = vmul.f32 %v1272, %v1194
        %v1295 = vmul.f32 %v1274, %v1195
        %v1296 = vmul.f32 %v1276, %v1196
        %v1297 = vadd.f32 %v1289, %v1293
        %v1298 = vadd.f32 %v1290, %v1294
        %v1299 = vadd.f32 %v1291, %v1295
        %v1300 = vadd.f32 %v1292, %v1296
        %v1301 = vpack.c.bf16 %v1297, %v1297
        %v1302 = vpack.c.bf16 %v1298, %v1298
        %v1303 = vpack.c.bf16 %v1299, %v1299
        %v1304 = vpack.c.bf16 %v1300, %v1300
        %1305 = vst [vmem:[%s457] sm:$0xf] %v1301
        %1306 = vst [vmem:[%s457 + $0x4] sm:$0xf] %v1302
        %1307 = vst [vmem:[%s457 + $0x8] sm:$0xf] %v1303
        %1308 = vst [vmem:[%s457 + $0xc] sm:$0xf] %v1304
        %v1309 = vpack.c.bf16 %v821, %v821
        %v1310 = vpack.c.bf16 %v823, %v823
        %v1311 = vpack.c.bf16 %v826, %v826
        %v1312 = vpack.c.bf16 %v828, %v828
        %1313 = vst [vmem:[%s464] sm:$0xf] %v1309
        %1314 = vst [vmem:[%s464 + $0x4] sm:$0xf] %v1310
        %1315 = vst [vmem:[%s464 + $0x8] sm:$0xf] %v1311
        %1316 = vst [vmem:[%s464 + $0xc] sm:$0xf] %v1312
        %s1317 = sand.u32 %s241, 1
        %s1318 = scalar_lea.sflag [#allocation4], %s1317
        %s1319 = sand.u32 %s241, 1
        %s1320 = smul.addr %s1319, 16
        %s1321 = scalar_lea.vmem [#allocation5], %s1320
        %s1322 = sand.u32 %s29, 1
        %s1323 = scalar_lea.sflag [#allocation7], %s1322
        %s1324 = sand.u32 %s269, 1
        %s1325 = smul.addr %s1324, 16
        %s1326 = scalar_lea.vmem [#allocation6], %s1325
        %s1327 = sand.u32 %s29, 1
        %s1328 = scalar_lea.sflag [#allocation7], %s1327
        %s1329 = sand.u32 %s297, 1
        %s1330 = smul.addr %s1329, 16
        %s1331 = scalar_lea.vmem [#allocation8], %s1330
        // Predicated region
        $region57: #{tpu_custom_call.1} parent=51 // pred_check
          %p1332 = pneg %p251
        $region58: #{tpu_custom_call.1} parent=51 // pred_check_branch
          %1334 = sbr.rel (%p1332) target = $region60
        $region59: #{tpu_custom_call.1} parent=51 // pred_region
          %s1335 = smul.u32 4, %s34
          %1337 = vsyncadd %s1318, 0
          %s1338 = smul.addr %s33, 4
          %s1339 = sadd.s32 %s1335, %s1338
          %s1340 = smul.addr %s1339, 4
          %s1341 = scalar_lea.hbm %s8, %s1340
          %s1342 = sshll.u32 %s1321, 4
          %s1343 = int_to_ptr.vmem [resolvable:$true] %s1342
          %s1344 = sshll.u32 %s1341, 4
          %s1345 = int_to_ptr.hbm [resolvable:$true] %s1344
          %1350 = dma.vmem_to_hbm [thread:$0]  %s1343, 256, %s1345, %s1318, 64, 64, 4
        $region60: #{tpu_custom_call.1} parent=51 // pred_fallthru
          _
        // Predicated region
        $region61: #{tpu_custom_call.1} parent=51 // pred_check
          %p1351 = pneg %p279
        $region62: #{tpu_custom_call.1} parent=51 // pred_check_branch
          %1353 = sbr.rel (%p1351) target = $region64
        $region63: #{tpu_custom_call.1} parent=51 // pred_region
          %s1354 = smul.u32 4, %s34
          %1356 = vsyncadd %s1323, 0
          %s1357 = smul.addr %s33, 4
          %s1358 = sadd.s32 %s1354, %s1357
          %s1359 = smul.addr %s1358, 4
          %s1360 = scalar_lea.hbm %s9, %s1359
          %s1361 = sshll.u32 %s1326, 4
          %s1362 = int_to_ptr.vmem [resolvable:$true] %s1361
          %s1363 = sshll.u32 %s1360, 4
          %s1364 = int_to_ptr.hbm [resolvable:$true] %s1363
          %1369 = dma.vmem_to_hbm [thread:$0]  %s1362, 256, %s1364, %s1323, 64, 64, 4
        $region64: #{tpu_custom_call.1} parent=51 // pred_fallthru
          _
        // Predicated region
        $region65: #{tpu_custom_call.1} parent=51 // pred_check
          %p1370 = pneg %p307
        $region66: #{tpu_custom_call.1} parent=51 // pred_check_branch
          %1372 = sbr.rel (%p1370) target = $region68
        $region67: #{tpu_custom_call.1} parent=51 // pred_region
          %s1373 = smul.u32 4, %s34
          %1375 = vsyncadd %s1328, 0
          %s1376 = smul.addr %s33, 4
          %s1377 = sadd.s32 %s1373, %s1376
          %s1378 = smul.addr %s1377, 4
          %s1379 = scalar_lea.hbm %s10, %s1378
          %s1380 = sshll.u32 %s1331, 4
          %s1381 = int_to_ptr.vmem [resolvable:$true] %s1380
          %s1382 = sshll.u32 %s1379, 4
          %s1383 = int_to_ptr.hbm [resolvable:$true] %s1382
          %1388 = dma.vmem_to_hbm [thread:$0]  %s1381, 256, %s1383, %s1328, 64, 64, 4
        $region68: #{tpu_custom_call.1} parent=51 // pred_fallthru
          _
      $region52: #{tpu_custom_call.1} parent=5 // pred_fallthru
        _
      %p1389 = scmp.le.s32.totalorder 2, %s24
      // Predicated region
      $region69: #{tpu_custom_call.1} parent=5 // pred_check
        %p1390 = pneg %p1389
      $region70: #{tpu_custom_call.1} parent=5 // pred_check_branch
        %1392 = sbr.rel (%p1390) target = $region72
      $region71: #{tpu_custom_call.1} parent=5 // pred_region
        %s1393 = ssub.s32 %s24, 2
        // Predicated region
        $region73: #{tpu_custom_call.1} parent=71 // pred_check
          %p1394 = pneg %p257
        $region74: #{tpu_custom_call.1} parent=71 // pred_check_branch
          %1396 = sbr.rel (%p1394) target = $region76
        $region75: #{tpu_custom_call.1} parent=71 // pred_region
          %s1397 = sand.u32 %s242, 1
          %s1398 = scalar_lea.sflag [#allocation4], %s1397
          %s1399 = sand.u32 %s242, 1
          %s1400 = smul.addr %s1399, 16
          %s1401 = scalar_lea.vmem [#allocation5], %s1400
          %1403 = dma.done %s1398, 256
        $region76: #{tpu_custom_call.1} parent=71 // pred_fallthru
          _
        // Predicated region
        $region77: #{tpu_custom_call.1} parent=71 // pred_check
          %p1404 = pneg %p285
        $region78: #{tpu_custom_call.1} parent=71 // pred_check_branch
          %1406 = sbr.rel (%p1404) target = $region80
        $region79: #{tpu_custom_call.1} parent=71 // pred_region
          %s1407 = sand.u32 %s30, 1
          %s1408 = scalar_lea.sflag [#allocation7], %s1407
          %s1409 = sand.u32 %s270, 1
          %s1410 = smul.addr %s1409, 16
          %s1411 = scalar_lea.vmem [#allocation6], %s1410
          %1413 = dma.done %s1408, 256
        $region80: #{tpu_custom_call.1} parent=71 // pred_fallthru
          _
        // Predicated region
        $region81: #{tpu_custom_call.1} parent=71 // pred_check
          %p1414 = pneg %p313
        $region82: #{tpu_custom_call.1} parent=71 // pred_check_branch
          %1416 = sbr.rel (%p1414) target = $region84
        $region83: #{tpu_custom_call.1} parent=71 // pred_region
          %s1417 = sand.u32 %s30, 1
          %s1418 = scalar_lea.sflag [#allocation7], %s1417
          %s1419 = sand.u32 %s298, 1
          %s1420 = smul.addr %s1419, 16
          %s1421 = scalar_lea.vmem [#allocation8], %s1420
          %1423 = dma.done %s1418, 256
        $region84: #{tpu_custom_call.1} parent=71 // pred_fallthru
          _
      $region72: #{tpu_custom_call.1} parent=5 // pred_fallthru
        _
    $region6: #{tpu_custom_call.1} parent=1 // loop_footer
      %s28 = sadd.s32 1, %s24
    $region7: #{tpu_custom_call.1} parent=1 // loop_footer_branch
      %23 = sbr.rel target = $region3
    $region8: #{tpu_custom_call.1} parent=1 // loop_exit
      _
    %1424 = vsyncpa [#allocation3], 1
    %s1425 = scalar_lea.sflag [#allocation3], 1
    %1426 = vsyncpa %s1425, 1
    %1427 = vsyncpa [#allocation4], 1
    %s1428 = scalar_lea.sflag [#allocation4], 1
    %1429 = vsyncpa %s1428, 1
    %1430 = vsyncpa [#allocation7], 1
    %s1431 = scalar_lea.sflag [#allocation7], 1
    %1432 = vsyncpa %s1431, 1

</llo_original>
